<compile_context>
chip_gen: v6e
topology: v6e:2x2x1
jax: 0.10.0
libtpu: 0.0.40
codegen_flags: <defaults>
</compile_context>

<pallas_src>
import jax
import jax.numpy as jnp
from jax.experimental import pallas as pl
from jax.experimental.pallas import tpu as pltpu

D_MODEL = 128
D_COORD = 2
D_STATE = 2
D_TGT   = 4
TILE_N_MAX = 1024   # sweep 1024/2048 on real batches; v5e: stay <= ~2048


def _choose_tile_n(n, max_tile=TILE_N_MAX, min_tile=8):
    """Tile rows: multiple of 8, <= max_tile, and >= 2 grid steps (v7x megacore)."""
    half = -(-n // 2)            # ceil(n / 2)  -> at least 2 grid steps
    t = -(-half // 8) * 8        # round up to sublane multiple
    return max(min_tile, min(max_tile, t))


def _fusion_kernel(states_ref, w1b1_ref, w2_ref, wslab_ref, bias_ref,
                   f3_ref, g3_ref, out_ref):
    """One tile_n-row tile of the fused states_mlp + fusion_mlp forward.

    states_ref : (tile_n, D_STATE)        f32
    w1b1_ref   : (3, D_MODEL//2)          f32   rows = [w1[0], w1[1], b1]
    w2_ref     : (D_MODEL//2, D_MODEL)    bf16
    wslab_ref  : (3, D_MODEL, D_MODEL)    bf16  [w3, f1_state, f2]
    bias_ref   : (4, D_MODEL)             f32   [b2, b3, g1_eff, g2]
    f3_ref     : (D_MODEL, D_TGT)         bf16
    g3_ref     : (1, D_TGT)               f32
    out_ref    : (tile_n, D_TGT)          f32
    """
    f32 = jnp.float32
    bf16 = jnp.bfloat16
    s = states_ref[...]                                          # (tile_n, 2) f32

    # ---- states_mlp layer 1 (K=2): two VPU rank-1 updates, no MXU relayout.
    h = (s[:, 0:1] * w1b1_ref[0:1, :]
         + s[:, 1:2] * w1b1_ref[1:2, :]
         + w1b1_ref[2:3, :])                                     # (tile_n, 64)
    h = jnp.maximum(h, 0.0)                                      # ReLU; Dropout eval no-op

    # ---- states_mlp layer 2: (tile_n,64) @ (64,128)
    h = jnp.dot(h.astype(bf16), w2_ref[...], preferred_element_type=f32) + bias_ref[0:1, :]
    h = jnp.maximum(h, 0.0)

    # ---- states_mlp layer 3: (tile_n,128) @ (128,128)
    state = jnp.dot(h.astype(bf16), wslab_ref[0], preferred_element_type=f32) + bias_ref[1:2, :]

    # ---- fusion_mlp layer 1 on cat([geom_expanded, state]):
    #      geom half was hoisted into bias_ref[2] (g1_eff = geom @ F1_geom + g1).
    fused = jnp.dot(state.astype(bf16), wslab_ref[1], preferred_element_type=f32) + bias_ref[2:3, :]
    fused = jax.nn.gelu(fused, approximate=True)                 # tanh GELU -> EUP

    # ---- fusion_mlp layer 2
    fused = jnp.dot(fused.astype(bf16), wslab_ref[2], preferred_element_type=f32) + bias_ref[3:4, :]
    fused = jax.nn.gelu(fused, approximate=True)

    # ---- fusion_mlp layer 3: narrow (tile_n,128)@(128,4) -> narrow 16 B/row store.
    out_ref[...] = jnp.dot(fused.astype(bf16), f3_ref[...], preferred_element_type=f32) + g3_ref[...]


def geometric_concat_fused(states, geom, params, tile_n=None):
    """states: (N, d_state) f32, geom: (1, d_model) f32 -> (N, d_tgt) f32."""
    (w1, b1, w2, b2, w3, b3, f1g, f1s, g1, f2, g2, f3, g3) = params
    N = states.shape[0]
    f32 = jnp.float32
    bf16 = jnp.bfloat16

    if tile_n is None:
        tile_n = _choose_tile_n(N)

    # Hoist the grid-invariant geom half of fusion layer 1 into its bias.
    g1_eff = geom @ f1g + g1                                     # (1, D_MODEL) f32

    # Pack constants into small slabs (constant index_map -> fetched once).
    w1b1  = jnp.concatenate([w1, b1], axis=0)                    # (3, 64)      f32
    w2b   = w2.astype(bf16)                                      # (64, 128)    bf16
    wslab = jnp.stack([w3, f1s, f2], axis=0).astype(bf16)        # (3, 128,128) bf16
    bias  = jnp.concatenate([b2, b3, g1_eff, g2], axis=0)        # (4, 128)     f32
    f3b   = f3.astype(bf16)                                      # (128, 4)     bf16

    # Pad batch to a multiple of tile_n (padded rows are cheap: 16 B/row out).
    n_tiles = pl.cdiv(N, tile_n)
    n_pad = n_tiles * tile_n
    states_p = jnp.pad(states, ((0, n_pad - N), (0, 0)))

    out = pl.pallas_call(
        _fusion_kernel,
        out_shape=jax.ShapeDtypeStruct((n_pad, D_TGT), jnp.float32),
        grid=(n_tiles,),
        in_specs=[
            pl.BlockSpec((tile_n, D_STATE), lambda i: (i, 0)),          # states tile
            pl.BlockSpec((3, D_MODEL // 2), lambda i: (0, 0)),          # w1/b1 slab
            pl.BlockSpec((D_MODEL // 2, D_MODEL), lambda i: (0, 0)),    # w2
            pl.BlockSpec((3, D_MODEL, D_MODEL), lambda i: (0, 0, 0)),   # 128x128 weight slab
            pl.BlockSpec((4, D_MODEL), lambda i: (0, 0)),               # bias slab
            pl.BlockSpec((D_MODEL, D_TGT), lambda i: (0, 0)),           # f3
            pl.BlockSpec((1, D_TGT), lambda i: (0, 0)),                 # g3
        ],
        out_specs=pl.BlockSpec((tile_n, D_TGT), lambda i: (i, 0)),
        compiler_params=pltpu.CompilerParams(dimension_semantics=("parallel",)),
    )(states_p, w1b1, w2b, wslab, bias, f3b, g3)

    return out[:N]                                               # row slice only


# ---------------------------------------------------------------------------
# Plain-JAX glue: parameter init + GeometricModule stand-in + references
# ---------------------------------------------------------------------------
def init_params(key):
    def dense(key, fan_in, fan_out):
        kw, kb = jax.random.split(key)
        scale = 1.0 / jnp.sqrt(fan_in)
        w = jax.random.uniform(kw, (fan_in, fan_out), jnp.float32, -scale, scale)
        b = jax.random.uniform(kb, (1, fan_out), jnp.float32, -scale, scale)
        return w, b

    keys = jax.random.split(key, 8)
    w1, b1 = dense(keys[0], D_STATE, D_MODEL // 2)
    w2, b2 = dense(keys[1], D_MODEL // 2, D_MODEL)
    w3, b3 = dense(keys[2], D_MODEL, D_MODEL)
    f1, g1 = dense(keys[3], 2 * D_MODEL, D_MODEL)     # fusion layer 1 on concat(2*d_model)
    f1g, f1s = f1[:D_MODEL], f1[D_MODEL:]             # split: geom half / state half
    f2, g2 = dense(keys[4], D_MODEL, D_MODEL)
    f3, g3 = dense(keys[5], D_MODEL, D_TGT)
    wg, bg = dense(keys[6], D_COORD, D_MODEL)         # GeometricModule stand-in
    kernel_params = (w1, b1, w2, b2, w3, b3, f1g, f1s, g1, f2, g2, f3, g3)
    return kernel_params, (wg, bg)


def geometric_module_standin(coordinates, length, distances, wg, bg):
    # TODO(synk): real GeometricModule unavailable; deterministic masked-mean + linear + tanh stand-in.
    L = coordinates.shape[0]
    mask = (jnp.arange(L) < length).astype(jnp.float32)[:, None]
    pooled = jnp.sum(coordinates * mask, axis=0, keepdims=True) / jnp.maximum(length, 1).astype(jnp.float32)
    d_feat = jnp.mean(distances)
    geom = jnp.tanh(pooled @ wg + bg + d_feat)        # (1, d_model)
    return geom, None


def reference_exact(states, geom, params):
    """Exact f32 / erf-GELU semantics of the PyTorch module."""
    (w1, b1, w2, b2, w3, b3, f1g, f1s, g1, f2, g2, f3, g3) = params
    h = jnp.maximum(states @ w1 + b1, 0.0)
    h = jnp.maximum(h @ w2 + b2, 0.0)
    state = h @ w3 + b3
    geom_expanded = jnp.broadcast_to(geom, (state.shape[0], D_MODEL))
    fused = jnp.concatenate([geom_expanded, state], axis=1)
    fused = jax.nn.gelu(fused @ jnp.concatenate([f1g, f1s], axis=0) + g1, approximate=False)
    fused = jax.nn.gelu(fused @ f2 + g2, approximate=False)
    return fused @ f3 + g3


def reference_matched(states, geom, params):
    """Mirror of the kernel's numerics (bf16 MXU inputs, tanh GELU, hoisted geom bias)."""
    (w1, b1, w2, b2, w3, b3, f1g, f1s, g1, f2, g2, f3, g3) = params
    f32, bf16 = jnp.float32, jnp.bfloat16
    g1_eff = geom @ f1g + g1
    h = states[:, 0:1] * w1[0:1, :] + states[:, 1:2] * w1[1:2, :] + b1
    h = jnp.maximum(h, 0.0)
    h = jnp.dot(h.astype(bf16), w2.astype(bf16), preferred_element_type=f32) + b2
    h = jnp.maximum(h, 0.0)
    state = jnp.dot(h.astype(bf16), w3.astype(bf16), preferred_element_type=f32) + b3
    fused = jnp.dot(state.astype(bf16), f1s.astype(bf16), preferred_element_type=f32) + g1_eff
    fused = jax.nn.gelu(fused, approximate=True)
    fused = jnp.dot(fused.astype(bf16), f2.astype(bf16), preferred_element_type=f32) + g2
    fused = jax.nn.gelu(fused, approximate=True)
    return jnp.dot(fused.astype(bf16), f3.astype(bf16), preferred_element_type=f32) + g3


if __name__ == "__main__":
    key = jax.random.PRNGKey(0)
    k_par, k_coord, k_state, k_dist = jax.random.split(key, 4)

    kernel_params, (wg, bg) = init_params(k_par)

    N, L = 300, 8                                        # non-multiple batch exercises padding path
    coordinates = jax.random.normal(k_coord, (L, D_COORD), jnp.float32)
    length = jnp.int32(6)
    states = jax.random.normal(k_state, (N, D_STATE), jnp.float32)
    distances = jax.random.normal(k_dist, (L, L), jnp.float32)

    geom, _ = geometric_module_standin(coordinates, length, distances, wg, bg)

    out = geometric_concat_fused(states, geom, kernel_params)
    out = jax.block_until_ready(out)

    ref_m = reference_matched(states, geom, kernel_params)
    ref_e = reference_exact(states, geom, kernel_params)

    assert out.shape == (N, D_TGT)
    # Tight check against a reference with identical numerics (bf16 + tanh GELU).
    assert jnp.allclose(out, ref_m, atol=2e-3, rtol=2e-3)
    # Loose check against the exact f32 / erf-GELU module semantics.
    assert jnp.allclose(out, ref_e, atol=1e-1, rtol=1e-1)

    print("KERNEL_OK")
</pallas_src>

<mosaic_0001>
module attributes {stable_mosaic.version = 11 : i64} {
  func.func @_fusion_kernel(%arg0: i32, %arg1: memref<152x2xf32, #tpu.memory_space<vmem>>, %arg2: memref<3x64xf32, #tpu.memory_space<vmem>>, %arg3: memref<64x128xbf16, #tpu.memory_space<vmem>>, %arg4: memref<3x128x128xbf16, #tpu.memory_space<vmem>>, %arg5: memref<4x128xf32, #tpu.memory_space<vmem>>, %arg6: memref<128x4xbf16, #tpu.memory_space<vmem>>, %arg7: memref<1x4xf32, #tpu.memory_space<vmem>>, %arg8: memref<152x4xf32, #tpu.memory_space<vmem>>) attributes {dimension_semantics = [#tpu.dimension_semantics<parallel>], iteration_bounds = array<i64: 2>, scalar_prefetch = 0 : i64, scratch_operands = 0 : i64, tpu.core_type = #tpu.core_type<tc>, window_params = [{transform_indices = @transform_0, window_bounds = array<i64: 152, 2>}, {pipeline_mode = #tpu.pipeline_mode<synchronous>, transform_indices = @transform_1, window_bounds = array<i64: 3, 64>}, {pipeline_mode = #tpu.pipeline_mode<synchronous>, transform_indices = @transform_2, window_bounds = array<i64: 64, 128>}, {pipeline_mode = #tpu.pipeline_mode<synchronous>, transform_indices = @transform_3, window_bounds = array<i64: 3, 128, 128>}, {pipeline_mode = #tpu.pipeline_mode<synchronous>, transform_indices = @transform_4, window_bounds = array<i64: 4, 128>}, {pipeline_mode = #tpu.pipeline_mode<synchronous>, transform_indices = @transform_5, window_bounds = array<i64: 128, 4>}, {pipeline_mode = #tpu.pipeline_mode<synchronous>, transform_indices = @transform_6, window_bounds = array<i64: 1, 4>}, {transform_indices = @transform_7, window_bounds = array<i64: 152, 4>}]} {
    %c0 = arith.constant 0 : index
    %c0_0 = arith.constant 0 : index
    %0 = vector.load %arg1[%c0, %c0_0] : memref<152x2xf32, #tpu.memory_space<vmem>>, vector<152x2xf32>
    %1 = vector.extract_strided_slice %0 {offsets = [0, 0], sizes = [152, 1], strides = [1, 1]} : vector<152x2xf32> to vector<152x1xf32>
    %c0_1 = arith.constant 0 : index
    %c0_2 = arith.constant 0 : index
    %2 = vector.load %arg2[%c0_1, %c0_2] : memref<3x64xf32, #tpu.memory_space<vmem>>, vector<1x64xf32>
    %3 = vector.broadcast %1 : vector<152x1xf32> to vector<152x64xf32>
    %4 = vector.broadcast %2 : vector<1x64xf32> to vector<152x64xf32>
    %5 = arith.mulf %3, %4 : vector<152x64xf32>
    %6 = vector.extract_strided_slice %0 {offsets = [0, 1], sizes = [152, 1], strides = [1, 1]} : vector<152x2xf32> to vector<152x1xf32>
    %c1 = arith.constant 1 : index
    %c0_3 = arith.constant 0 : index
    %7 = vector.load %arg2[%c1, %c0_3] : memref<3x64xf32, #tpu.memory_space<vmem>>, vector<1x64xf32>
    %8 = vector.broadcast %6 : vector<152x1xf32> to vector<152x64xf32>
    %9 = vector.broadcast %7 : vector<1x64xf32> to vector<152x64xf32>
    %10 = arith.mulf %8, %9 : vector<152x64xf32>
    %11 = arith.addf %5, %10 : vector<152x64xf32>
    %c2 = arith.constant 2 : index
    %c0_4 = arith.constant 0 : index
    %12 = vector.load %arg2[%c2, %c0_4] : memref<3x64xf32, #tpu.memory_space<vmem>>, vector<1x64xf32>
    %13 = vector.broadcast %12 : vector<1x64xf32> to vector<152x64xf32>
    %14 = arith.addf %11, %13 : vector<152x64xf32>
    %cst = arith.constant 0.000000e+00 : f32
    %15 = vector.broadcast %cst : f32 to vector<152x64xf32>
    %16 = arith.maximumf %14, %15 : vector<152x64xf32>
    %17 = arith.truncf %16 : vector<152x64xf32> to vector<152x64xbf16>
    %c0_5 = arith.constant 0 : index
    %c0_6 = arith.constant 0 : index
    %18 = vector.load %arg3[%c0_5, %c0_6] : memref<64x128xbf16, #tpu.memory_space<vmem>>, vector<64x128xbf16>
    %cst_7 = arith.constant dense<0.000000e+00> : vector<152x128xf32>
    %19 = tpu.matmul %17, %18, %cst_7 {dimension_numbers = #tpu.dot_dimension_numbers<[1], [0], [0], [1], [0, 0, 1, 1], [], []>} : vector<152x64xbf16>, vector<64x128xbf16>, vector<152x128xf32> -> vector<152x128xf32>
    %c0_8 = arith.constant 0 : index
    %c0_9 = arith.constant 0 : index
    %20 = vector.load %arg5[%c0_8, %c0_9] : memref<4x128xf32, #tpu.memory_space<vmem>>, vector<1x128xf32>
    %21 = vector.broadcast %20 : vector<1x128xf32> to vector<152x128xf32>
    %22 = arith.addf %19, %21 : vector<152x128xf32>
    %cst_10 = arith.constant 0.000000e+00 : f32
    %23 = vector.broadcast %cst_10 : f32 to vector<152x128xf32>
    %24 = arith.maximumf %22, %23 : vector<152x128xf32>
    %25 = arith.truncf %24 : vector<152x128xf32> to vector<152x128xbf16>
    %c0_11 = arith.constant 0 : index
    %c0_12 = arith.constant 0 : index
    %c0_13 = arith.constant 0 : index
    %26 = vector.load %arg4[%c0_11, %c0_12, %c0_13] : memref<3x128x128xbf16, #tpu.memory_space<vmem>>, vector<1x128x128xbf16>
    %27 = vector.shape_cast %26 : vector<1x128x128xbf16> to vector<128x128xbf16>
    %cst_14 = arith.constant dense<0.000000e+00> : vector<152x128xf32>
    %28 = tpu.matmul %25, %27, %cst_14 {dimension_numbers = #tpu.dot_dimension_numbers<[1], [0], [0], [1], [0, 0, 1, 1], [], []>} : vector<152x128xbf16>, vector<128x128xbf16>, vector<152x128xf32> -> vector<152x128xf32>
    %c1_15 = arith.constant 1 : index
    %c0_16 = arith.constant 0 : index
    %29 = vector.load %arg5[%c1_15, %c0_16] : memref<4x128xf32, #tpu.memory_space<vmem>>, vector<1x128xf32>
    %30 = vector.broadcast %29 : vector<1x128xf32> to vector<152x128xf32>
    %31 = arith.addf %28, %30 : vector<152x128xf32>
    %32 = arith.truncf %31 : vector<152x128xf32> to vector<152x128xbf16>
    %c1_17 = arith.constant 1 : index
    %c0_18 = arith.constant 0 : index
    %c0_19 = arith.constant 0 : index
    %33 = vector.load %arg4[%c1_17, %c0_18, %c0_19] : memref<3x128x128xbf16, #tpu.memory_space<vmem>>, vector<1x128x128xbf16>
    %34 = vector.shape_cast %33 : vector<1x128x128xbf16> to vector<128x128xbf16>
    %cst_20 = arith.constant dense<0.000000e+00> : vector<152x128xf32>
    %35 = tpu.matmul %32, %34, %cst_20 {dimension_numbers = #tpu.dot_dimension_numbers<[1], [0], [0], [1], [0, 0, 1, 1], [], []>} : vector<152x128xbf16>, vector<128x128xbf16>, vector<152x128xf32> -> vector<152x128xf32>
    %c2_21 = arith.constant 2 : index
    %c0_22 = arith.constant 0 : index
    %36 = vector.load %arg5[%c2_21, %c0_22] : memref<4x128xf32, #tpu.memory_space<vmem>>, vector<1x128xf32>
    %37 = vector.broadcast %36 : vector<1x128xf32> to vector<152x128xf32>
    %38 = arith.addf %35, %37 : vector<152x128xf32>
    %39 = arith.mulf %38, %38 : vector<152x128xf32>
    %40 = arith.mulf %38, %39 : vector<152x128xf32>
    %cst_23 = arith.constant 4.471500e-02 : f32
    %41 = vector.broadcast %cst_23 : f32 to vector<152x128xf32>
    %42 = arith.mulf %41, %40 : vector<152x128xf32>
    %43 = arith.addf %38, %42 : vector<152x128xf32>
    %cst_24 = arith.constant 0.797884583 : f32
    %44 = vector.broadcast %cst_24 : f32 to vector<152x128xf32>
    %45 = arith.mulf %44, %43 : vector<152x128xf32>
    %46 = math.tanh %45 : vector<152x128xf32>
    %cst_25 = arith.constant 1.000000e+00 : f32
    %47 = vector.broadcast %cst_25 : f32 to vector<152x128xf32>
    %48 = arith.addf %47, %46 : vector<152x128xf32>
    %cst_26 = arith.constant 5.000000e-01 : f32
    %49 = vector.broadcast %cst_26 : f32 to vector<152x128xf32>
    %50 = arith.mulf %49, %48 : vector<152x128xf32>
    %51 = arith.mulf %38, %50 : vector<152x128xf32>
    %52 = arith.truncf %51 : vector<152x128xf32> to vector<152x128xbf16>
    %c2_27 = arith.constant 2 : index
    %c0_28 = arith.constant 0 : index
    %c0_29 = arith.constant 0 : index
    %53 = vector.load %arg4[%c2_27, %c0_28, %c0_29] : memref<3x128x128xbf16, #tpu.memory_space<vmem>>, vector<1x128x128xbf16>
    %54 = vector.shape_cast %53 : vector<1x128x128xbf16> to vector<128x128xbf16>
    %cst_30 = arith.constant dense<0.000000e+00> : vector<152x128xf32>
    %55 = tpu.matmul %52, %54, %cst_30 {dimension_numbers = #tpu.dot_dimension_numbers<[1], [0], [0], [1], [0, 0, 1, 1], [], []>} : vector<152x128xbf16>, vector<128x128xbf16>, vector<152x128xf32> -> vector<152x128xf32>
    %c3 = arith.constant 3 : index
    %c0_31 = arith.constant 0 : index
    %56 = vector.load %arg5[%c3, %c0_31] : memref<4x128xf32, #tpu.memory_space<vmem>>, vector<1x128xf32>
    %57 = vector.broadcast %56 : vector<1x128xf32> to vector<152x128xf32>
    %58 = arith.addf %55, %57 : vector<152x128xf32>
    %59 = arith.mulf %58, %58 : vector<152x128xf32>
    %60 = arith.mulf %58, %59 : vector<152x128xf32>
    %cst_32 = arith.constant 4.471500e-02 : f32
    %61 = vector.broadcast %cst_32 : f32 to vector<152x128xf32>
    %62 = arith.mulf %61, %60 : vector<152x128xf32>
    %63 = arith.addf %58, %62 : vector<152x128xf32>
    %cst_33 = arith.constant 0.797884583 : f32
    %64 = vector.broadcast %cst_33 : f32 to vector<152x128xf32>
    %65 = arith.mulf %64, %63 : vector<152x128xf32>
    %66 = math.tanh %65 : vector<152x128xf32>
    %cst_34 = arith.constant 1.000000e+00 : f32
    %67 = vector.broadcast %cst_34 : f32 to vector<152x128xf32>
    %68 = arith.addf %67, %66 : vector<152x128xf32>
    %cst_35 = arith.constant 5.000000e-01 : f32
    %69 = vector.broadcast %cst_35 : f32 to vector<152x128xf32>
    %70 = arith.mulf %69, %68 : vector<152x128xf32>
    %71 = arith.mulf %58, %70 : vector<152x128xf32>
    %72 = arith.truncf %71 : vector<152x128xf32> to vector<152x128xbf16>
    %c0_36 = arith.constant 0 : index
    %c0_37 = arith.constant 0 : index
    %73 = vector.load %arg6[%c0_36, %c0_37] : memref<128x4xbf16, #tpu.memory_space<vmem>>, vector<128x4xbf16>
    %cst_38 = arith.constant dense<0.000000e+00> : vector<152x4xf32>
    %74 = tpu.matmul %72, %73, %cst_38 {dimension_numbers = #tpu.dot_dimension_numbers<[1], [0], [0], [1], [0, 0, 1, 1], [], []>} : vector<152x128xbf16>, vector<128x4xbf16>, vector<152x4xf32> -> vector<152x4xf32>
    %c0_39 = arith.constant 0 : index
    %c0_40 = arith.constant 0 : index
    %75 = vector.load %arg7[%c0_39, %c0_40] : memref<1x4xf32, #tpu.memory_space<vmem>>, vector<1x4xf32>
    %76 = vector.broadcast %75 : vector<1x4xf32> to vector<152x4xf32>
    %77 = arith.addf %74, %76 : vector<152x4xf32>
    %c0_41 = arith.constant 0 : index
    %c0_42 = arith.constant 0 : index
    %78 = vector.load %arg8[%c0_41, %c0_42] : memref<152x4xf32, #tpu.memory_space<vmem>>, vector<152x4xf32>
    tpu.vector_store %arg8[%c0_41, %c0_42], %77 {strides = array<i32>} : memref<152x4xf32, #tpu.memory_space<vmem>>, vector<152x4xf32>,
    return
  }
  func.func @transform_0(%arg0: i32) -> (i32, i32) {
    %c0_i32 = arith.constant 0 : i32
    %c0_i32_0 = arith.constant 0 : i32
    return %arg0, %c0_i32 : i32, i32
  }
  func.func @transform_1(%arg0: i32) -> (i32, i32) {
    %c0_i32 = arith.constant 0 : i32
    %c0_i32_0 = arith.constant 0 : i32
    %c0_i32_1 = arith.constant 0 : i32
    return %c0_i32, %c0_i32_0 : i32, i32
  }
  func.func @transform_2(%arg0: i32) -> (i32, i32) {
    %c0_i32 = arith.constant 0 : i32
    %c0_i32_0 = arith.constant 0 : i32
    %c0_i32_1 = arith.constant 0 : i32
    return %c0_i32, %c0_i32_0 : i32, i32
  }
  func.func @transform_3(%arg0: i32) -> (i32, i32, i32) {
    %c0_i32 = arith.constant 0 : i32
    %c0_i32_0 = arith.constant 0 : i32
    %c0_i32_1 = arith.constant 0 : i32
    %c0_i32_2 = arith.constant 0 : i32
    return %c0_i32, %c0_i32_0, %c0_i32_1 : i32, i32, i32
  }
  func.func @transform_4(%arg0: i32) -> (i32, i32) {
    %c0_i32 = arith.constant 0 : i32
    %c0_i32_0 = arith.constant 0 : i32
    %c0_i32_1 = arith.constant 0 : i32
    return %c0_i32, %c0_i32_0 : i32, i32
  }
  func.func @transform_5(%arg0: i32) -> (i32, i32) {
    %c0_i32 = arith.constant 0 : i32
    %c0_i32_0 = arith.constant 0 : i32
    %c0_i32_1 = arith.constant 0 : i32
    return %c0_i32, %c0_i32_0 : i32, i32
  }
  func.func @transform_6(%arg0: i32) -> (i32, i32) {
    %c0_i32 = arith.constant 0 : i32
    %c0_i32_0 = arith.constant 0 : i32
    %c0_i32_1 = arith.constant 0 : i32
    return %c0_i32, %c0_i32_0 : i32, i32
  }
  func.func @transform_7(%arg0: i32) -> (i32, i32) {
    %c0_i32 = arith.constant 0 : i32
    %c0_i32_0 = arith.constant 0 : i32
    return %arg0, %c0_i32 : i32, i32
  }
}

</mosaic_0001>

<llo_original>
// kernel: tpu_custom_call.1
$region0: #{tpu_custom_call.1}
  #allocation0 [shape = 'u32[]', space=smem, size = 0x4, offset = 0x4, fixed_abs, tag = 'smem constant byte address 0x4 - core index']
  #allocation1 [shape = 'u32[144,128]{1,0:T(1,128)}', space=vmem, size = 0x12000, scoped, tag = 'internal scratch']
  %s0 = inlined_call_operand.vmem [shape: f32[304,2], index: 0, kind: input, shape index: {}]
  %s1 = inlined_call_operand.vmem [shape: f32[3,64], index: 1, kind: input, shape index: {}]
  %s2 = inlined_call_operand.vmem [shape: bf16[64,128], index: 2, kind: input, shape index: {}]
  %s3 = inlined_call_operand.vmem [shape: bf16[3,128,128], index: 3, kind: input, shape index: {}]
  %s4 = inlined_call_operand.vmem [shape: f32[4,128], index: 4, kind: input, shape index: {}]
  %s5 = inlined_call_operand.vmem [shape: bf16[128,4], index: 5, kind: input, shape index: {}]
  %s6 = inlined_call_operand.vmem [shape: f32[1,4], index: 6, kind: input, shape index: {}]
  %s7 = inlined_call_operand.vmem [shape: f32[304,4], index: 7, kind: output, shape index: {}]
  %s8 = sld [smem:[#allocation0]]
  $region61: #{tpu_custom_call.1} parent=0
    _
  %s10 = ssub.s32 1, %s8
  %s11 = scalar_select 0, %s10, %s8
  loop: start=0, step=1, limit=4
  $region2: #{tpu_custom_call.1} parent=0 // loop_pre_header
    _
  $region3: #{tpu_custom_call.1} parent=0 // loop_header
    %s13 = sphi 0, %s17
    %p14 = scmp.ge.s32.totalorder %s13, 4
    %s23 = sphi 0, %s25
    %s26 = sphi 0, %s23
    %s27 = sphi 0, %s26
    %s43 = sphi 0, %s27
    %s47 = sphi 0, %s47
    %s49 = sphi 0, %s47
    %s50 = sphi 0, %s49
    %s64 = sphi 0, %s50
    %s68 = sphi 0, %s68
    %s70 = sphi 0, %s68
    %s71 = sphi 0, %s70
    %s85 = sphi 0, %s71
    %s89 = sphi 0, %s89
    %s91 = sphi 0, %s89
    %s92 = sphi 0, %s91
    %s106 = sphi 0, %s92
    %s110 = sphi 0, %s110
    %s112 = sphi 0, %s110
    %s113 = sphi 0, %s112
    %s127 = sphi 0, %s113
    %s131 = sphi 0, %s131
    %s133 = sphi 0, %s131
    %s134 = sphi 0, %s133
    %s148 = sphi 0, %s134
    %s152 = sphi 0, %s152
    %s154 = sphi 0, %s152
    %s155 = sphi 0, %s154
    %s169 = sphi 0, %s155
    %s175 = sphi 0, %s177
    %s178 = sphi 0, %s175
    %s179 = sphi 0, %s178
    %s195 = sphi 0, %s179
  $region4: #{tpu_custom_call.1} parent=0 // loop_header_branch
    %16 = sbr.rel (%p14) target = $region8
  $region5: #{tpu_custom_call.1} parent=0 // loop_body
    %s18 = ssub.s32 %s13, 1
    %s19 = ssub.s32 %s13, 2
    %s20 = sadd.s32 %s13, 1
    %s21 = ssub.s32 %s13, %s20
    %p22 = scmp.eq.s32.totalorder %s21, 0
    %s24 = sadd.s32 %s23, 1
    %s25 = scalar_select %p22, %s23, %s24
    %p28 = pneg %p22
    %p29 = scmp.eq.s32.totalorder %s13, 1
    %p30 = por %p28, %p29
    %p31 = scmp.ne.s32.totalorder %s23, %s26
    %p32 = scmp.eq.s32.totalorder %s13, 0
    %p33 = por %p31, %p32
    %p34 = scmp.ne.s32.totalorder %s23, %s26
    %p35 = scmp.eq.s32.totalorder %s18, 1
    %p36 = por %p34, %p35
    %p37 = scmp.ne.s32.totalorder %s26, %s27
    %p38 = scmp.eq.s32.totalorder %s18, 0
    %p39 = por %p37, %p38
    %p40 = scmp.ne.s32.totalorder %s26, %s27
    %p41 = scmp.eq.s32.totalorder %s19, 1
    %p42 = por %p40, %p41
    %p44 = scmp.ne.s32.totalorder %s27, %s43
    %p45 = scmp.eq.s32.totalorder %s19, 0
    %p46 = por %p44, %p45
    %s48 = sadd.s32 %s47, 1
    %p51 = scmp.eq.s32.totalorder %s13, 1
    %p52 = scmp.ne.s32.totalorder %s47, %s49
    %p53 = scmp.eq.s32.totalorder %s13, 0
    %p54 = por %p52, %p53
    %p55 = scmp.ne.s32.totalorder %s47, %s49
    %p56 = scmp.eq.s32.totalorder %s18, 1
    %p57 = por %p55, %p56
    %p58 = scmp.ne.s32.totalorder %s49, %s50
    %p59 = scmp.eq.s32.totalorder %s18, 0
    %p60 = por %p58, %p59
    %p61 = scmp.ne.s32.totalorder %s49, %s50
    %p62 = scmp.eq.s32.totalorder %s19, 1
    %p63 = por %p61, %p62
    %p65 = scmp.ne.s32.totalorder %s50, %s64
    %p66 = scmp.eq.s32.totalorder %s19, 0
    %p67 = por %p65, %p66
    %s69 = sadd.s32 %s68, 1
    %p72 = scmp.eq.s32.totalorder %s13, 1
    %p73 = scmp.ne.s32.totalorder %s68, %s70
    %p74 = scmp.eq.s32.totalorder %s13, 0
    %p75 = por %p73, %p74
    %p76 = scmp.ne.s32.totalorder %s68, %s70
    %p77 = scmp.eq.s32.totalorder %s18, 1
    %p78 = por %p76, %p77
    %p79 = scmp.ne.s32.totalorder %s70, %s71
    %p80 = scmp.eq.s32.totalorder %s18, 0
    %p81 = por %p79, %p80
    %p82 = scmp.ne.s32.totalorder %s70, %s71
    %p83 = scmp.eq.s32.totalorder %s19, 1
    %p84 = por %p82, %p83
    %p86 = scmp.ne.s32.totalorder %s71, %s85
    %p87 = scmp.eq.s32.totalorder %s19, 0
    %p88 = por %p86, %p87
    %s90 = sadd.s32 %s89, 1
    %p93 = scmp.eq.s32.totalorder %s13, 1
    %p94 = scmp.ne.s32.totalorder %s89, %s91
    %p95 = scmp.eq.s32.totalorder %s13, 0
    %p96 = por %p94, %p95
    %p97 = scmp.ne.s32.totalorder %s89, %s91
    %p98 = scmp.eq.s32.totalorder %s18, 1
    %p99 = por %p97, %p98
    %p100 = scmp.ne.s32.totalorder %s91, %s92
    %p101 = scmp.eq.s32.totalorder %s18, 0
    %p102 = por %p100, %p101
    %p103 = scmp.ne.s32.totalorder %s91, %s92
    %p104 = scmp.eq.s32.totalorder %s19, 1
    %p105 = por %p103, %p104
    %p107 = scmp.ne.s32.totalorder %s92, %s106
    %p108 = scmp.eq.s32.totalorder %s19, 0
    %p109 = por %p107, %p108
    %s111 = sadd.s32 %s110, 1
    %p114 = scmp.eq.s32.totalorder %s13, 1
    %p115 = scmp.ne.s32.totalorder %s110, %s112
    %p116 = scmp.eq.s32.totalorder %s13, 0
    %p117 = por %p115, %p116
    %p118 = scmp.ne.s32.totalorder %s110, %s112
    %p119 = scmp.eq.s32.totalorder %s18, 1
    %p120 = por %p118, %p119
    %p121 = scmp.ne.s32.totalorder %s112, %s113
    %p122 = scmp.eq.s32.totalorder %s18, 0
    %p123 = por %p121, %p122
    %p124 = scmp.ne.s32.totalorder %s112, %s113
    %p125 = scmp.eq.s32.totalorder %s19, 1
    %p126 = por %p124, %p125
    %p128 = scmp.ne.s32.totalorder %s113, %s127
    %p129 = scmp.eq.s32.totalorder %s19, 0
    %p130 = por %p128, %p129
    %s132 = sadd.s32 %s131, 1
    %p135 = scmp.eq.s32.totalorder %s13, 1
    %p136 = scmp.ne.s32.totalorder %s131, %s133
    %p137 = scmp.eq.s32.totalorder %s13, 0
    %p138 = por %p136, %p137
    %p139 = scmp.ne.s32.totalorder %s131, %s133
    %p140 = scmp.eq.s32.totalorder %s18, 1
    %p141 = por %p139, %p140
    %p142 = scmp.ne.s32.totalorder %s133, %s134
    %p143 = scmp.eq.s32.totalorder %s18, 0
    %p144 = por %p142, %p143
    %p145 = scmp.ne.s32.totalorder %s133, %s134
    %p146 = scmp.eq.s32.totalorder %s19, 1
    %p147 = por %p145, %p146
    %p149 = scmp.ne.s32.totalorder %s134, %s148
    %p150 = scmp.eq.s32.totalorder %s19, 0
    %p151 = por %p149, %p150
    %s153 = sadd.s32 %s152, 1
    %p156 = scmp.eq.s32.totalorder %s13, 1
    %p157 = scmp.ne.s32.totalorder %s152, %s154
    %p158 = scmp.eq.s32.totalorder %s13, 0
    %p159 = por %p157, %p158
    %p160 = scmp.ne.s32.totalorder %s152, %s154
    %p161 = scmp.eq.s32.totalorder %s18, 1
    %p162 = por %p160, %p161
    %p163 = scmp.ne.s32.totalorder %s154, %s155
    %p164 = scmp.eq.s32.totalorder %s18, 0
    %p165 = por %p163, %p164
    %p166 = scmp.ne.s32.totalorder %s154, %s155
    %p167 = scmp.eq.s32.totalorder %s19, 1
    %p168 = por %p166, %p167
    %p170 = scmp.ne.s32.totalorder %s155, %s169
    %p171 = scmp.eq.s32.totalorder %s19, 0
    %p172 = por %p170, %p171
    %s173 = ssub.s32 %s13, %s20
    %p174 = scmp.eq.s32.totalorder %s173, 0
    %s176 = sadd.s32 %s175, 1
    %s177 = scalar_select %p174, %s175, %s176
    %p180 = pneg %p174
    %p181 = scmp.eq.s32.totalorder %s13, 1
    %p182 = por %p180, %p181
    %p183 = scmp.ne.s32.totalorder %s175, %s178
    %p184 = scmp.eq.s32.totalorder %s13, 0
    %p185 = por %p183, %p184
    %p186 = scmp.ne.s32.totalorder %s175, %s178
    %p187 = scmp.eq.s32.totalorder %s18, 1
    %p188 = por %p186, %p187
    %p189 = scmp.ne.s32.totalorder %s178, %s179
    %p190 = scmp.eq.s32.totalorder %s18, 0
    %p191 = por %p189, %p190
    %p192 = scmp.ne.s32.totalorder %s178, %s179
    %p193 = scmp.eq.s32.totalorder %s19, 1
    %p194 = por %p192, %p193
    %p196 = scmp.ne.s32.totalorder %s179, %s195
    %p197 = scmp.eq.s32.totalorder %s19, 0
    %p198 = por %p196, %p197
    %p199 = scmp.le.s32.totalorder 1, %s13
    %p200 = scmp.lt.s32.totalorder %s13, 3
    %p201 = pnand %p199, %p200
    %p202 = pneg %p201
    // Predicated region
    $region9: #{tpu_custom_call.1} parent=5 // pred_check
      _
    $region10: #{tpu_custom_call.1} parent=5 // pred_check_branch
      %204 = sbr.rel (%p201) target = $region12
    $region11: #{tpu_custom_call.1} parent=5 // pred_region
      %s205 = ssub.s32 %s13, 1
      // Predicated region
      $region13: #{tpu_custom_call.1} parent=11 // pred_check
        %p206 = pneg %p60
      $region14: #{tpu_custom_call.1} parent=11 // pred_check_branch
        %208 = sbr.rel (%p206) target = $region16
      $region15: #{tpu_custom_call.1} parent=11 // pred_region
        _
      $region16: #{tpu_custom_call.1} parent=11 // pred_fallthru
        _
      // Predicated region
      $region17: #{tpu_custom_call.1} parent=11 // pred_check
        %p209 = pneg %p81
      $region18: #{tpu_custom_call.1} parent=11 // pred_check_branch
        %211 = sbr.rel (%p209) target = $region20
      $region19: #{tpu_custom_call.1} parent=11 // pred_region
        _
      $region20: #{tpu_custom_call.1} parent=11 // pred_fallthru
        _
      // Predicated region
      $region21: #{tpu_custom_call.1} parent=11 // pred_check
        %p212 = pneg %p102
      $region22: #{tpu_custom_call.1} parent=11 // pred_check_branch
        %214 = sbr.rel (%p212) target = $region24
      $region23: #{tpu_custom_call.1} parent=11 // pred_region
        _
      $region24: #{tpu_custom_call.1} parent=11 // pred_fallthru
        _
      // Predicated region
      $region25: #{tpu_custom_call.1} parent=11 // pred_check
        %p215 = pneg %p123
      $region26: #{tpu_custom_call.1} parent=11 // pred_check_branch
        %217 = sbr.rel (%p215) target = $region28
      $region27: #{tpu_custom_call.1} parent=11 // pred_region
        _
      $region28: #{tpu_custom_call.1} parent=11 // pred_fallthru
        _
      // Predicated region
      $region29: #{tpu_custom_call.1} parent=11 // pred_check
        %p218 = pneg %p144
      $region30: #{tpu_custom_call.1} parent=11 // pred_check_branch
        %220 = sbr.rel (%p218) target = $region32
      $region31: #{tpu_custom_call.1} parent=11 // pred_region
        _
      $region32: #{tpu_custom_call.1} parent=11 // pred_fallthru
        _
      // Predicated region
      $region33: #{tpu_custom_call.1} parent=11 // pred_check
        %p221 = pneg %p165
      $region34: #{tpu_custom_call.1} parent=11 // pred_check_branch
        %223 = sbr.rel (%p221) target = $region36
      $region35: #{tpu_custom_call.1} parent=11 // pred_region
        _
      $region36: #{tpu_custom_call.1} parent=11 // pred_fallthru
        _
    $region12: #{tpu_custom_call.1} parent=5 // pred_fallthru
      _
    %p224 = scmp.lt.s32.totalorder %s13, 2
    // Predicated region
    $region37: #{tpu_custom_call.1} parent=5 // pred_check
      %p225 = pneg %p224
    $region38: #{tpu_custom_call.1} parent=5 // pred_check_branch
      %227 = sbr.rel (%p225) target = $region40
    $region39: #{tpu_custom_call.1} parent=5 // pred_region
      // Predicated region
      $region41: #{tpu_custom_call.1} parent=39 // pred_check
        %p228 = pneg %p33
      $region42: #{tpu_custom_call.1} parent=39 // pred_check_branch
        %230 = sbr.rel (%p228) target = $region44
      $region43: #{tpu_custom_call.1} parent=39 // pred_region
        %s231 = smul.u32 19, %s13
        %p232 = scmp.lt.s32.totalorder %s231, 37
        %s233 = scalar_select %p232, %s231, 37
        %s234 = smul.addr %s233, 8
        %s235 = scalar_lea.vmem %s0, %s234
        %s236 = smul.u32 19, %s13
      $region44: #{tpu_custom_call.1} parent=39 // pred_fallthru
        _
    $region40: #{tpu_custom_call.1} parent=5 // pred_fallthru
      _
    %p237 = scmp.le.s32.totalorder 1, %s13
    %p238 = scmp.lt.s32.totalorder %s13, 3
    %p239 = pnand %p237, %p238
    %p240 = pneg %p239
    // Predicated region
    $region45: #{tpu_custom_call.1} parent=5 // pred_check
      _
    $region46: #{tpu_custom_call.1} parent=5 // pred_check_branch
      %242 = sbr.rel (%p239) target = $region48
    $region47: #{tpu_custom_call.1} parent=5 // pred_region
      %s243 = ssub.s32 %s13, 1
      %s244 = smul.u32 19, %s18
      %p245 = scmp.lt.s32.totalorder %s244, 37
      %s246 = scalar_select %p245, %s244, 37
      %s247 = smul.addr %s246, 8
      %s248 = scalar_lea.vmem %s0, %s247
      %p249 = pneg %p39
      %p250 = pneg %p36
      %p251 = pneg %p60
      %p252 = pneg %p57
      %p253 = pneg %p81
      %p254 = pneg %p78
      %p255 = pneg %p102
      %p256 = pneg %p99
      %p257 = pneg %p123
      %p258 = pneg %p120
      %p259 = pneg %p144
      %p260 = pneg %p141
      %p261 = pneg %p165
      %p262 = pneg %p162
      %p263 = pneg %p191
      %p264 = pneg %p188
      %s265 = smul.u32 19, %s18
      %p266 = scmp.lt.s32.totalorder %s265, 37
      %s267 = scalar_select %p266, %s265, 37
      %s268 = smul.addr %s267, 8
      %s269 = scalar_lea.vmem %s7, %s268
      %s270 = smul.u32 19, %s18
      %p271 = scmp.lt.s32.totalorder %s270, 37
      %s272 = scalar_select %p271, %s270, 37
      %s273 = smul.addr %s272, 8
      %s274 = scalar_lea.vmem %s0, %s273
      %s275 = smul.u32 19, %s18
      %s276 = smul.u32 19, %s18
      %p277 = scmp.lt.s32.totalorder %s276, 37
      %s278 = scalar_select %p277, %s276, 37
      %s279 = smul.addr %s278, 8
      %s280 = scalar_lea.vmem %s7, %s279
      %s281 = smul.u32 19, %s18
      %v283 = vld [vmem:[%s274] sm:$0xff]
      %v284 = vld [vmem:[%s274 + $0x8] sm:$0xff]
      %v285 = vld [vmem:[%s274 + $0x10] sm:$0xff]
      %v286 = vld [vmem:[%s274 + $0x18] sm:$0xff]
      %v287 = vld [vmem:[%s274 + $0x20] sm:$0xff]
      %v288 = vld [vmem:[%s274 + $0x28] sm:$0xff]
      %v289 = vld [vmem:[%s274 + $0x30] sm:$0xff]
      %v290 = vld [vmem:[%s274 + $0x38] sm:$0xff]
      %v291 = vld [vmem:[%s274 + $0x40] sm:$0xff]
      %v292 = vld [vmem:[%s274 + $0x48] sm:$0xff]
      %v293 = vld [vmem:[%s274 + $0x50] sm:$0xff]
      %v294 = vld [vmem:[%s274 + $0x58] sm:$0xff]
      %v295 = vld [vmem:[%s274 + $0x60] sm:$0xff]
      %v296 = vld [vmem:[%s274 + $0x68] sm:$0xff]
      %v297 = vld [vmem:[%s274 + $0x70] sm:$0xff]
      %v298 = vld [vmem:[%s274 + $0x78] sm:$0xff]
      %v299 = vld [vmem:[%s274 + $0x80] sm:$0xff]
      %v300 = vld [vmem:[%s274 + $0x88] sm:$0xff]
      %v301 = vld [vmem:[%s274 + $0x90] sm:$0xff]
      %v302 = vld [vmem:[%s1] sm:$0x1]
      %304 = vset.pattern.permute.xlu0 0
      %305 = vperm.xlu0 %304, %v283
      %v306 = vpop.permute.xlu0 %305
      %309 = vset.pattern.permute.xlu0 0
      %310 = vperm.xlu0 %309, %v284
      %v311 = vpop.permute.xlu0 %310
      %314 = vset.pattern.permute.xlu0 0
      %315 = vperm.xlu0 %314, %v285
      %v316 = vpop.permute.xlu0 %315
      %319 = vset.pattern.permute.xlu0 0
      %320 = vperm.xlu0 %319, %v286
      %v321 = vpop.permute.xlu0 %320
      %324 = vset.pattern.permute.xlu0 0
      %325 = vperm.xlu0 %324, %v287
      %v326 = vpop.permute.xlu0 %325
      %329 = vset.pattern.permute.xlu0 0
      %330 = vperm.xlu0 %329, %v288
      %v331 = vpop.permute.xlu0 %330
      %334 = vset.pattern.permute.xlu0 0
      %335 = vperm.xlu0 %334, %v289
      %v336 = vpop.permute.xlu0 %335
      %339 = vset.pattern.permute.xlu0 0
      %340 = vperm.xlu0 %339, %v290
      %v341 = vpop.permute.xlu0 %340
      %344 = vset.pattern.permute.xlu0 0
      %345 = vperm.xlu0 %344, %v291
      %v346 = vpop.permute.xlu0 %345
      %349 = vset.pattern.permute.xlu0 0
      %350 = vperm.xlu0 %349, %v292
      %v351 = vpop.permute.xlu0 %350
      %354 = vset.pattern.permute.xlu0 0
      %355 = vperm.xlu0 %354, %v293
      %v356 = vpop.permute.xlu0 %355
      %359 = vset.pattern.permute.xlu0 0
      %360 = vperm.xlu0 %359, %v294
      %v361 = vpop.permute.xlu0 %360
      %364 = vset.pattern.permute.xlu0 0
      %365 = vperm.xlu0 %364, %v295
      %v366 = vpop.permute.xlu0 %365
      %369 = vset.pattern.permute.xlu0 0
      %370 = vperm.xlu0 %369, %v296
      %v371 = vpop.permute.xlu0 %370
      %374 = vset.pattern.permute.xlu0 0
      %375 = vperm.xlu0 %374, %v297
      %v376 = vpop.permute.xlu0 %375
      %379 = vset.pattern.permute.xlu0 0
      %380 = vperm.xlu0 %379, %v298
      %v381 = vpop.permute.xlu0 %380
      %384 = vset.pattern.permute.xlu0 0
      %385 = vperm.xlu0 %384, %v299
      %v386 = vpop.permute.xlu0 %385
      %389 = vset.pattern.permute.xlu0 0
      %390 = vperm.xlu0 %389, %v300
      %v391 = vpop.permute.xlu0 %390
      %394 = vset.pattern.permute.xlu0 0
      %395 = vperm.xlu0 %394, %v301
      %v396 = vpop.permute.xlu0 %395
      %v398 = vlaneseq
      %v399 = vshrl.u32 %v398, 7
      %v400 = vsub.s32 0, %v399
      %v401 = vrot.slane %v302, %v400
      %v402 = vmul.f32 %v306, %v401
      %v403 = vmul.f32 %v311, %v401
      %v404 = vmul.f32 %v316, %v401
      %v405 = vmul.f32 %v321, %v401
      %v406 = vmul.f32 %v326, %v401
      %v407 = vmul.f32 %v331, %v401
      %v408 = vmul.f32 %v336, %v401
      %v409 = vmul.f32 %v341, %v401
      %v410 = vmul.f32 %v346, %v401
      %v411 = vmul.f32 %v351, %v401
      %v412 = vmul.f32 %v356, %v401
      %v413 = vmul.f32 %v361, %v401
      %v414 = vmul.f32 %v366, %v401
      %v415 = vmul.f32 %v371, %v401
      %v416 = vmul.f32 %v376, %v401
      %v417 = vmul.f32 %v381, %v401
      %v418 = vmul.f32 %v386, %v401
      %v419 = vmul.f32 %v391, %v401
      %v420 = vmul.f32 %v396, %v401
      %v421 = vld [vmem:[%s1 + $0x1] sm:$0x1]
      %422 = vset.pattern.permute.xlu0 1
      %423 = vperm.xlu0 %422, %v283
      %v424 = vpop.permute.xlu0 %423
      %426 = vset.pattern.permute.xlu0 1
      %427 = vperm.xlu0 %426, %v284
      %v428 = vpop.permute.xlu0 %427
      %430 = vset.pattern.permute.xlu0 1
      %431 = vperm.xlu0 %430, %v285
      %v432 = vpop.permute.xlu0 %431
      %434 = vset.pattern.permute.xlu0 1
      %435 = vperm.xlu0 %434, %v286
      %v436 = vpop.permute.xlu0 %435
      %438 = vset.pattern.permute.xlu0 1
      %439 = vperm.xlu0 %438, %v287
      %v440 = vpop.permute.xlu0 %439
      %442 = vset.pattern.permute.xlu0 1
      %443 = vperm.xlu0 %442, %v288
      %v444 = vpop.permute.xlu0 %443
      %446 = vset.pattern.permute.xlu0 1
      %447 = vperm.xlu0 %446, %v289
      %v448 = vpop.permute.xlu0 %447
      %450 = vset.pattern.permute.xlu0 1
      %451 = vperm.xlu0 %450, %v290
      %v452 = vpop.permute.xlu0 %451
      %454 = vset.pattern.permute.xlu0 1
      %455 = vperm.xlu0 %454, %v291
      %v456 = vpop.permute.xlu0 %455
      %458 = vset.pattern.permute.xlu0 1
      %459 = vperm.xlu0 %458, %v292
      %v460 = vpop.permute.xlu0 %459
      %462 = vset.pattern.permute.xlu0 1
      %463 = vperm.xlu0 %462, %v293
      %v464 = vpop.permute.xlu0 %463
      %466 = vset.pattern.permute.xlu0 1
      %467 = vperm.xlu0 %466, %v294
      %v468 = vpop.permute.xlu0 %467
      %470 = vset.pattern.permute.xlu0 1
      %471 = vperm.xlu0 %470, %v295
      %v472 = vpop.permute.xlu0 %471
      %474 = vset.pattern.permute.xlu0 1
      %475 = vperm.xlu0 %474, %v296
      %v476 = vpop.permute.xlu0 %475
      %478 = vset.pattern.permute.xlu0 1
      %479 = vperm.xlu0 %478, %v297
      %v480 = vpop.permute.xlu0 %479
      %482 = vset.pattern.permute.xlu0 1
      %483 = vperm.xlu0 %482, %v298
      %v484 = vpop.permute.xlu0 %483
      %486 = vset.pattern.permute.xlu0 1
      %487 = vperm.xlu0 %486, %v299
      %v488 = vpop.permute.xlu0 %487
      %490 = vset.pattern.permute.xlu0 1
      %491 = vperm.xlu0 %490, %v300
      %v492 = vpop.permute.xlu0 %491
      %494 = vset.pattern.permute.xlu0 1
      %495 = vperm.xlu0 %494, %v301
      %v496 = vpop.permute.xlu0 %495
      %v498 = vlaneseq
      %v499 = vshrl.u32 %v498, 7
      %v500 = vsub.s32 0, %v499
      %v501 = vrot.slane %v421, %v500
      %v502 = vmul.f32 %v424, %v501
      %v503 = vmul.f32 %v428, %v501
      %v504 = vmul.f32 %v432, %v501
      %v505 = vmul.f32 %v436, %v501
      %v506 = vmul.f32 %v440, %v501
      %v507 = vmul.f32 %v444, %v501
      %v508 = vmul.f32 %v448, %v501
      %v509 = vmul.f32 %v452, %v501
      %v510 = vmul.f32 %v456, %v501
      %v511 = vmul.f32 %v460, %v501
      %v512 = vmul.f32 %v464, %v501
      %v513 = vmul.f32 %v468, %v501
      %v514 = vmul.f32 %v472, %v501
      %v515 = vmul.f32 %v476, %v501
      %v516 = vmul.f32 %v480, %v501
      %v517 = vmul.f32 %v484, %v501
      %v518 = vmul.f32 %v488, %v501
      %v519 = vmul.f32 %v492, %v501
      %v520 = vmul.f32 %v496, %v501
      %v521 = vadd.f32 %v402, %v502
      %v522 = vadd.f32 %v403, %v503
      %v523 = vadd.f32 %v404, %v504
      %v524 = vadd.f32 %v405, %v505
      %v525 = vadd.f32 %v406, %v506
      %v526 = vadd.f32 %v407, %v507
      %v527 = vadd.f32 %v408, %v508
      %v528 = vadd.f32 %v409, %v509
      %v529 = vadd.f32 %v410, %v510
      %v530 = vadd.f32 %v411, %v511
      %v531 = vadd.f32 %v412, %v512
      %v532 = vadd.f32 %v413, %v513
      %v533 = vadd.f32 %v414, %v514
      %v534 = vadd.f32 %v415, %v515
      %v535 = vadd.f32 %v416, %v516
      %v536 = vadd.f32 %v417, %v517
      %v537 = vadd.f32 %v418, %v518
      %v538 = vadd.f32 %v419, %v519
      %v539 = vadd.f32 %v420, %v520
      %v540 = vld [vmem:[%s1 + $0x2] sm:$0x1]
      %v541 = vlaneseq
      %v542 = vshrl.u32 %v541, 7
      %v543 = vsub.s32 0, %v542
      %v544 = vrot.slane %v540, %v543
      %v545 = vadd.f32 %v521, %v544
      %v546 = vadd.f32 %v522, %v544
      %v547 = vadd.f32 %v523, %v544
      %v548 = vadd.f32 %v524, %v544
      %v549 = vadd.f32 %v525, %v544
      %v550 = vadd.f32 %v526, %v544
      %v551 = vadd.f32 %v527, %v544
      %v552 = vadd.f32 %v528, %v544
      %v553 = vadd.f32 %v529, %v544
      %v554 = vadd.f32 %v530, %v544
      %v555 = vadd.f32 %v531, %v544
      %v556 = vadd.f32 %v532, %v544
      %v557 = vadd.f32 %v533, %v544
      %v558 = vadd.f32 %v534, %v544
      %v559 = vadd.f32 %v535, %v544
      %v560 = vadd.f32 %v536, %v544
      %v561 = vadd.f32 %v537, %v544
      %v562 = vadd.f32 %v538, %v544
      %v563 = vadd.f32 %v539, %v544
      %v564 = vmax.f32 %v545, 0.0
      %v565 = vmax.f32 %v546, 0.0
      %v566 = vmax.f32 %v547, 0.0
      %v567 = vmax.f32 %v548, 0.0
      %v568 = vmax.f32 %v549, 0.0
      %v569 = vmax.f32 %v550, 0.0
      %v570 = vmax.f32 %v551, 0.0
      %v571 = vmax.f32 %v552, 0.0
      %v572 = vmax.f32 %v553, 0.0
      %v573 = vmax.f32 %v554, 0.0
      %v574 = vmax.f32 %v555, 0.0
      %v575 = vmax.f32 %v556, 0.0
      %v576 = vmax.f32 %v557, 0.0
      %v577 = vmax.f32 %v558, 0.0
      %v578 = vmax.f32 %v559, 0.0
      %v579 = vmax.f32 %v560, 0.0
      %v580 = vmax.f32 %v561, 0.0
      %v581 = vmax.f32 %v562, 0.0
      %v582 = vmax.f32 %v563, 0.0
      %v583 = vpack.c.bf16 %v565, %v564
      %v584 = vpack.c.bf16 %v567, %v566
      %v585 = vpack.c.bf16 %v569, %v568
      %v586 = vpack.c.bf16 %v571, %v570
      %v587 = vpack.c.bf16 %v573, %v572
      %v588 = vpack.c.bf16 %v575, %v574
      %v589 = vpack.c.bf16 %v577, %v576
      %v590 = vpack.c.bf16 %v579, %v578
      %v591 = vpack.c.bf16 %v581, %v580
      %v592 = vpack.c.bf16 %v582, %v582
      %v593 = vld [vmem:[%s2] sm:$0xf]
      %v594 = vld [vmem:[%s2 + $0x4] sm:$0xf]
      %v595 = vld [vmem:[%s2 + $0x8] sm:$0xf]
      %v596 = vld [vmem:[%s2 + $0xc] sm:$0xf]
      %v597 = vld [vmem:[%s2 + $0x10] sm:$0xf]
      %v598 = vld [vmem:[%s2 + $0x14] sm:$0xf]
      %v599 = vld [vmem:[%s2 + $0x18] sm:$0xf]
      %v600 = vld [vmem:[%s2 + $0x1c] sm:$0xf]
      %v601 = vld [vmem:[%s4] sm:$0x1]
      %v602 = vlaneseq
      %v603 = vshrl.u32 %v602, 7
      %v604 = vsub.s32 0, %v603
      %v605 = vrot.slane %v601, %v604
      %v614 = vunpack.c.l.b16 %v593
      %v615 = vunpack.c.l.b16 %v594
      %v616 = vunpack.c.l.b16 %v595
      %v617 = vunpack.c.l.b16 %v596
      %v618 = vunpack.c.l.b16 %v597
      %v619 = vunpack.c.l.b16 %v598
      %v620 = vunpack.c.l.b16 %v599
      %v621 = vunpack.c.l.b16 %v600
      %v622 = vpack.c.b16 %v615, %v614
      %v623 = vpack.c.b16 %v617, %v616
      %v624 = vpack.c.b16 %v619, %v618
      %v625 = vpack.c.b16 %v621, %v620
      %vm630 = vcmask 523264
      %v632 = vsel %vm630, %v583, 0
      %v635 = vsel %vm630, %v584, 0
      %v638 = vsel %vm630, %v585, 0
      %v641 = vsel %vm630, %v586, 0
      %v644 = vsel %vm630, %v587, 0
      %v647 = vsel %vm630, %v588, 0
      %v650 = vsel %vm630, %v589, 0
      %v653 = vsel %vm630, %v590, 0
      %v656 = vsel %vm630, %v591, 0
      %v659 = vsel %vm630, %v592, 0
      %661 = vmatprep.subr.bf16.mxu0 0
      %662 = vmatpush1.bf16.msra.mxu0 0
      %663 = vmatprep.subr.bf16.mxu0 0
      %664 = vmatpush1.bf16.msra.mxu0 0
      %665 = vmatprep.subr.bf16.mxu0 0
      %666 = vmatpush1.bf16.msra.mxu0 0
      %667 = vmatprep.subr.bf16.mxu0 0
      %668 = vmatpush1.bf16.msra.mxu0 0
      %669 = vmatprep.subr.bf16.mxu0 0
      %670 = vmatpush1.bf16.msra.mxu0 %v625
      %671 = vmatprep.subr.bf16.mxu0 0
      %672 = vmatpush1.bf16.msra.mxu0 %v624
      %673 = vmatprep.subr.bf16.mxu0 0
      %674 = vmatpush1.bf16.msra.mxu0 %v623
      %675 = vmatprep.subr.bf16.mxu0 0
      %676 = vmatpush1.bf16.msra.mxu0 %v622
      %677 = vmatprep.subr.bf16.mxu0 0
      %678 = vmatpush2.bf16.msra.mxu0 0
      %679 = vmatprep.subr.bf16.mxu0 0
      %680 = vmatpush2.bf16.msra.mxu0 0
      %681 = vmatprep.subr.bf16.mxu0 0
      %682 = vmatpush2.bf16.msra.mxu0 0
      %683 = vmatprep.subr.bf16.mxu0 0
      %684 = vmatpush2.bf16.msra.mxu0 0
      %685 = vmatprep.subr.bf16.mxu0 0
      %686 = vmatpush2.bf16.msra.mxu0 0
      %687 = vmatprep.subr.bf16.mxu0 0
      %688 = vmatpush2.bf16.msra.mxu0 0
      %689 = vmatprep.subr.bf16.mxu0 0
      %690 = vmatpush2.bf16.msra.mxu0 0
      %691 = vmatprep.subr.bf16.mxu0 0
      %692 = vmatpush2.bf16.msra.mxu0 0
      %693 = vmatprep.mubr.bf16.mxu0 0
      %694 = vmatmul.mubr.bf16.gmra.mxu0 %v632
      %v695 = vpop.f32.mrf.mxu0
      %v696 = vadd.f32 %v605, %v695
      %v697 = vpop.f32.mrf.mxu0
      %v698 = vpop.f32.mrf.mxu0
      %v699 = vadd.f32 %v605, %v698
      %v700 = vpop.f32.mrf.mxu0
      %701 = vmatprep.mubr.bf16.mxu0 0
      %702 = vmatmul.mubr.bf16.gmra.mxu0 %v635
      %v703 = vpop.f32.mrf.mxu0
      %v704 = vadd.f32 %v605, %v703
      %v705 = vpop.f32.mrf.mxu0
      %v706 = vpop.f32.mrf.mxu0
      %v707 = vadd.f32 %v605, %v706
      %v708 = vpop.f32.mrf.mxu0
      %709 = vmatprep.mubr.bf16.mxu0 0
      %710 = vmatmul.mubr.bf16.gmra.mxu0 %v638
      %v711 = vpop.f32.mrf.mxu0
      %v712 = vadd.f32 %v605, %v711
      %v713 = vpop.f32.mrf.mxu0
      %v714 = vpop.f32.mrf.mxu0
      %v715 = vadd.f32 %v605, %v714
      %v716 = vpop.f32.mrf.mxu0
      %717 = vmatprep.mubr.bf16.mxu0 0
      %718 = vmatmul.mubr.bf16.gmra.mxu0 %v641
      %v719 = vpop.f32.mrf.mxu0
      %v720 = vadd.f32 %v605, %v719
      %v721 = vpop.f32.mrf.mxu0
      %v722 = vpop.f32.mrf.mxu0
      %v723 = vadd.f32 %v605, %v722
      %v724 = vpop.f32.mrf.mxu0
      %725 = vmatprep.mubr.bf16.mxu0 0
      %726 = vmatmul.mubr.bf16.gmra.mxu0 %v644
      %v727 = vpop.f32.mrf.mxu0
      %v728 = vadd.f32 %v605, %v727
      %v729 = vpop.f32.mrf.mxu0
      %v730 = vpop.f32.mrf.mxu0
      %v731 = vadd.f32 %v605, %v730
      %v732 = vpop.f32.mrf.mxu0
      %733 = vmatprep.mubr.bf16.mxu0 0
      %734 = vmatmul.mubr.bf16.gmra.mxu0 %v647
      %v735 = vpop.f32.mrf.mxu0
      %v736 = vadd.f32 %v605, %v735
      %v737 = vpop.f32.mrf.mxu0
      %v738 = vpop.f32.mrf.mxu0
      %v739 = vadd.f32 %v605, %v738
      %v740 = vpop.f32.mrf.mxu0
      %741 = vmatprep.mubr.bf16.mxu0 0
      %742 = vmatmul.mubr.bf16.gmra.mxu0 %v650
      %v743 = vpop.f32.mrf.mxu0
      %v744 = vadd.f32 %v605, %v743
      %v745 = vpop.f32.mrf.mxu0
      %v746 = vpop.f32.mrf.mxu0
      %v747 = vadd.f32 %v605, %v746
      %v748 = vpop.f32.mrf.mxu0
      %749 = vmatprep.mubr.bf16.mxu0 0
      %750 = vmatmul.mubr.bf16.gmra.mxu0 %v653
      %v751 = vpop.f32.mrf.mxu0
      %v752 = vadd.f32 %v605, %v751
      %v753 = vpop.f32.mrf.mxu0
      %v754 = vpop.f32.mrf.mxu0
      %v755 = vadd.f32 %v605, %v754
      %v756 = vpop.f32.mrf.mxu0
      %757 = vmatprep.mubr.bf16.mxu0 0
      %758 = vmatmul.mubr.bf16.gmra.mxu0 %v656
      %v759 = vpop.f32.mrf.mxu0
      %v760 = vadd.f32 %v605, %v759
      %v761 = vpop.f32.mrf.mxu0
      %v762 = vpop.f32.mrf.mxu0
      %v763 = vadd.f32 %v605, %v762
      %v764 = vpop.f32.mrf.mxu0
      %765 = vmatprep.mubr.bf16.mxu0 0
      %766 = vmatmul.mubr.bf16.gmra.mxu0 %v659
      %v767 = vpop.f32.mrf.mxu0
      %v768 = vadd.f32 %v605, %v767
      %v769 = vpop.f32.mrf.mxu0
      %v770 = vpop.f32.mrf.mxu0
      %v771 = vpop.f32.mrf.mxu0
      %772 = vdwg.mxu0
      %v773 = vmax.f32 %v696, 0.0
      %v774 = vmax.f32 %v699, 0.0
      %v775 = vmax.f32 %v704, 0.0
      %v776 = vmax.f32 %v707, 0.0
      %v777 = vmax.f32 %v712, 0.0
      %v778 = vmax.f32 %v715, 0.0
      %v779 = vmax.f32 %v720, 0.0
      %v780 = vmax.f32 %v723, 0.0
      %v781 = vmax.f32 %v728, 0.0
      %v782 = vmax.f32 %v731, 0.0
      %v783 = vmax.f32 %v736, 0.0
      %v784 = vmax.f32 %v739, 0.0
      %v785 = vmax.f32 %v744, 0.0
      %v786 = vmax.f32 %v747, 0.0
      %v787 = vmax.f32 %v752, 0.0
      %v788 = vmax.f32 %v755, 0.0
      %v789 = vmax.f32 %v760, 0.0
      %v790 = vmax.f32 %v763, 0.0
      %v791 = vmax.f32 %v768, 0.0
      %v792 = vpack.c.bf16 %v774, %v773
      %v793 = vpack.c.bf16 %v776, %v775
      %v794 = vpack.c.bf16 %v778, %v777
      %v795 = vpack.c.bf16 %v780, %v779
      %v796 = vpack.c.bf16 %v782, %v781
      %v797 = vpack.c.bf16 %v784, %v783
      %v798 = vpack.c.bf16 %v786, %v785
      %v799 = vpack.c.bf16 %v788, %v787
      %v800 = vpack.c.bf16 %v790, %v789
      %v801 = vpack.c.bf16 %v791, %v791
      %v802 = vld [vmem:[%s3] sm:$0xf]
      %v803 = vld [vmem:[%s3 + $0x4] sm:$0xf]
      %v804 = vld [vmem:[%s3 + $0x8] sm:$0xf]
      %v805 = vld [vmem:[%s3 + $0xc] sm:$0xf]
      %v806 = vld [vmem:[%s3 + $0x10] sm:$0xf]
      %v807 = vld [vmem:[%s3 + $0x14] sm:$0xf]
      %v808 = vld [vmem:[%s3 + $0x18] sm:$0xf]
      %v809 = vld [vmem:[%s3 + $0x1c] sm:$0xf]
      %v810 = vld [vmem:[%s3 + $0x20] sm:$0xf]
      %v811 = vld [vmem:[%s3 + $0x24] sm:$0xf]
      %v812 = vld [vmem:[%s3 + $0x28] sm:$0xf]
      %v813 = vld [vmem:[%s3 + $0x2c] sm:$0xf]
      %v814 = vld [vmem:[%s3 + $0x30] sm:$0xf]
      %v815 = vld [vmem:[%s3 + $0x34] sm:$0xf]
      %v816 = vld [vmem:[%s3 + $0x38] sm:$0xf]
      %v817 = vld [vmem:[%s3 + $0x3c] sm:$0xf]
      %v818 = vld [vmem:[%s4 + $0x1] sm:$0x1]
      %v819 = vlaneseq
      %v820 = vshrl.u32 %v819, 7
      %v821 = vsub.s32 0, %v820
      %v822 = vrot.slane %v818, %v821
      %v839 = vunpack.c.l.b16 %v802
      %v840 = vunpack.c.l.b16 %v803
      %v841 = vunpack.c.l.b16 %v804
      %v842 = vunpack.c.l.b16 %v805
      %v843 = vunpack.c.l.b16 %v806
      %v844 = vunpack.c.l.b16 %v807
      %v845 = vunpack.c.l.b16 %v808
      %v846 = vunpack.c.l.b16 %v809
      %v847 = vunpack.c.l.b16 %v810
      %v848 = vunpack.c.l.b16 %v811
      %v849 = vunpack.c.l.b16 %v812
      %v850 = vunpack.c.l.b16 %v813
      %v851 = vunpack.c.l.b16 %v814
      %v852 = vunpack.c.l.b16 %v815
      %v853 = vunpack.c.l.b16 %v816
      %v854 = vunpack.c.l.b16 %v817
      %v855 = vpack.c.b16 %v840, %v839
      %v856 = vpack.c.b16 %v842, %v841
      %v857 = vpack.c.b16 %v844, %v843
      %v858 = vpack.c.b16 %v846, %v845
      %v859 = vpack.c.b16 %v848, %v847
      %v860 = vpack.c.b16 %v850, %v849
      %v861 = vpack.c.b16 %v852, %v851
      %v862 = vpack.c.b16 %v854, %v853
      %871 = vmatprep.subr.bf16.mxu0 0
      %872 = vmatpush1.bf16.msra.mxu0 %v862
      %873 = vmatprep.subr.bf16.mxu0 0
      %874 = vmatpush1.bf16.msra.mxu0 %v861
      %875 = vmatprep.subr.bf16.mxu0 0
      %876 = vmatpush1.bf16.msra.mxu0 %v860
      %877 = vmatprep.subr.bf16.mxu0 0
      %878 = vmatpush1.bf16.msra.mxu0 %v859
      %879 = vmatprep.subr.bf16.mxu0 0
      %880 = vmatpush1.bf16.msra.mxu0 %v858
      %881 = vmatprep.subr.bf16.mxu0 0
      %882 = vmatpush1.bf16.msra.mxu0 %v857
      %883 = vmatprep.subr.bf16.mxu0 0
      %884 = vmatpush1.bf16.msra.mxu0 %v856
      %885 = vmatprep.subr.bf16.mxu0 0
      %886 = vmatpush1.bf16.msra.mxu0 %v855
      %887 = vmatprep.subr.bf16.mxu0 0
      %888 = vmatpush2.bf16.msra.mxu0 0
      %889 = vmatprep.subr.bf16.mxu0 0
      %890 = vmatpush2.bf16.msra.mxu0 0
      %891 = vmatprep.subr.bf16.mxu0 0
      %892 = vmatpush2.bf16.msra.mxu0 0
      %893 = vmatprep.subr.bf16.mxu0 0
      %894 = vmatpush2.bf16.msra.mxu0 0
      %895 = vmatprep.subr.bf16.mxu0 0
      %896 = vmatpush2.bf16.msra.mxu0 0
      %897 = vmatprep.subr.bf16.mxu0 0
      %898 = vmatpush2.bf16.msra.mxu0 0
      %899 = vmatprep.subr.bf16.mxu0 0
      %900 = vmatpush2.bf16.msra.mxu0 0
      %901 = vmatprep.subr.bf16.mxu0 0
      %902 = vmatpush2.bf16.msra.mxu0 0
      %903 = vmatprep.mubr.bf16.mxu0 0
      %904 = vmatmul.mubr.bf16.gmra.mxu0 %v792
      %v905 = vpop.f32.mrf.mxu0
      %v906 = vadd.f32 %v822, %v905
      %v907 = vpop.f32.mrf.mxu0
      %v908 = vpop.f32.mrf.mxu0
      %v909 = vadd.f32 %v822, %v908
      %v910 = vpop.f32.mrf.mxu0
      %911 = vmatprep.mubr.bf16.mxu0 0
      %912 = vmatmul.mubr.bf16.gmra.mxu0 %v793
      %v913 = vpop.f32.mrf.mxu0
      %v914 = vadd.f32 %v822, %v913
      %v915 = vpop.f32.mrf.mxu0
      %v916 = vpop.f32.mrf.mxu0
      %v917 = vadd.f32 %v822, %v916
      %v918 = vpop.f32.mrf.mxu0
      %919 = vmatprep.mubr.bf16.mxu0 0
      %920 = vmatmul.mubr.bf16.gmra.mxu0 %v794
      %v921 = vpop.f32.mrf.mxu0
      %v922 = vadd.f32 %v822, %v921
      %v923 = vpop.f32.mrf.mxu0
      %v924 = vpop.f32.mrf.mxu0
      %v925 = vadd.f32 %v822, %v924
      %v926 = vpop.f32.mrf.mxu0
      %927 = vmatprep.mubr.bf16.mxu0 0
      %928 = vmatmul.mubr.bf16.gmra.mxu0 %v795
      %v929 = vpop.f32.mrf.mxu0
      %v930 = vadd.f32 %v822, %v929
      %v931 = vpop.f32.mrf.mxu0
      %v932 = vpop.f32.mrf.mxu0
      %v933 = vadd.f32 %v822, %v932
      %v934 = vpop.f32.mrf.mxu0
      %935 = vmatprep.mubr.bf16.mxu0 0
      %936 = vmatmul.mubr.bf16.gmra.mxu0 %v796
      %v937 = vpop.f32.mrf.mxu0
      %v938 = vadd.f32 %v822, %v937
      %v939 = vpop.f32.mrf.mxu0
      %v940 = vpop.f32.mrf.mxu0
      %v941 = vadd.f32 %v822, %v940
      %v942 = vpop.f32.mrf.mxu0
      %943 = vmatprep.mubr.bf16.mxu0 0
      %944 = vmatmul.mubr.bf16.gmra.mxu0 %v797
      %v945 = vpop.f32.mrf.mxu0
      %v946 = vadd.f32 %v822, %v945
      %v947 = vpop.f32.mrf.mxu0
      %v948 = vpop.f32.mrf.mxu0
      %v949 = vadd.f32 %v822, %v948
      %v950 = vpop.f32.mrf.mxu0
      %951 = vmatprep.mubr.bf16.mxu0 0
      %952 = vmatmul.mubr.bf16.gmra.mxu0 %v798
      %v953 = vpop.f32.mrf.mxu0
      %v954 = vadd.f32 %v822, %v953
      %v955 = vpop.f32.mrf.mxu0
      %v956 = vpop.f32.mrf.mxu0
      %v957 = vadd.f32 %v822, %v956
      %v958 = vpop.f32.mrf.mxu0
      %959 = vmatprep.mubr.bf16.mxu0 0
      %960 = vmatmul.mubr.bf16.gmra.mxu0 %v799
      %v961 = vpop.f32.mrf.mxu0
      %v962 = vadd.f32 %v822, %v961
      %v963 = vpop.f32.mrf.mxu0
      %v964 = vpop.f32.mrf.mxu0
      %v965 = vadd.f32 %v822, %v964
      %v966 = vpop.f32.mrf.mxu0
      %967 = vmatprep.mubr.bf16.mxu0 0
      %968 = vmatmul.mubr.bf16.gmra.mxu0 %v800
      %v969 = vpop.f32.mrf.mxu0
      %v970 = vadd.f32 %v822, %v969
      %v971 = vpop.f32.mrf.mxu0
      %v972 = vpop.f32.mrf.mxu0
      %v973 = vadd.f32 %v822, %v972
      %v974 = vpop.f32.mrf.mxu0
      %975 = vmatprep.mubr.bf16.mxu0 0
      %976 = vmatmul.mubr.bf16.gmra.mxu0 %v801
      %v977 = vpop.f32.mrf.mxu0
      %v978 = vadd.f32 %v822, %v977
      %v979 = vpop.f32.mrf.mxu0
      %v980 = vpop.f32.mrf.mxu0
      %v981 = vpop.f32.mrf.mxu0
      %982 = vdwg.mxu0
      %v983 = vpack.c.bf16 %v909, %v906
      %v984 = vpack.c.bf16 %v917, %v914
      %v985 = vpack.c.bf16 %v925, %v922
      %v986 = vpack.c.bf16 %v933, %v930
      %v987 = vpack.c.bf16 %v941, %v938
      %v988 = vpack.c.bf16 %v949, %v946
      %v989 = vpack.c.bf16 %v957, %v954
      %v990 = vpack.c.bf16 %v965, %v962
      %v991 = vpack.c.bf16 %v973, %v970
      %v992 = vpack.c.bf16 %v978, %v978
      %s993 = scalar_lea.vmem %s3, 64
      %v994 = vld [vmem:[%s993] sm:$0xf]
      %v995 = vld [vmem:[%s993 + $0x4] sm:$0xf]
      %v996 = vld [vmem:[%s993 + $0x8] sm:$0xf]
      %v997 = vld [vmem:[%s993 + $0xc] sm:$0xf]
      %v998 = vld [vmem:[%s993 + $0x10] sm:$0xf]
      %v999 = vld [vmem:[%s993 + $0x14] sm:$0xf]
      %v1000 = vld [vmem:[%s993 + $0x18] sm:$0xf]
      %v1001 = vld [vmem:[%s993 + $0x1c] sm:$0xf]
      %v1002 = vld [vmem:[%s993 + $0x20] sm:$0xf]
      %v1003 = vld [vmem:[%s993 + $0x24] sm:$0xf]
      %v1004 = vld [vmem:[%s993 + $0x28] sm:$0xf]
      %v1005 = vld [vmem:[%s993 + $0x2c] sm:$0xf]
      %v1006 = vld [vmem:[%s993 + $0x30] sm:$0xf]
      %v1007 = vld [vmem:[%s993 + $0x34] sm:$0xf]
      %v1008 = vld [vmem:[%s993 + $0x38] sm:$0xf]
      %v1009 = vld [vmem:[%s993 + $0x3c] sm:$0xf]
      %v1010 = vld [vmem:[%s4 + $0x2] sm:$0x1]
      %v1011 = vlaneseq
      %v1012 = vshrl.u32 %v1011, 7
      %v1013 = vsub.s32 0, %v1012
      %v1014 = vrot.slane %v1010, %v1013
      %v1031 = vunpack.c.l.b16 %v994
      %v1032 = vunpack.c.l.b16 %v995
      %v1033 = vunpack.c.l.b16 %v996
      %v1034 = vunpack.c.l.b16 %v997
      %v1035 = vunpack.c.l.b16 %v998
      %v1036 = vunpack.c.l.b16 %v999
      %v1037 = vunpack.c.l.b16 %v1000
      %v1038 = vunpack.c.l.b16 %v1001
      %v1039 = vunpack.c.l.b16 %v1002
      %v1040 = vunpack.c.l.b16 %v1003
      %v1041 = vunpack.c.l.b16 %v1004
      %v1042 = vunpack.c.l.b16 %v1005
      %v1043 = vunpack.c.l.b16 %v1006
      %v1044 = vunpack.c.l.b16 %v1007
      %v1045 = vunpack.c.l.b16 %v1008
      %v1046 = vunpack.c.l.b16 %v1009
      %v1047 = vpack.c.b16 %v1032, %v1031
      %v1048 = vpack.c.b16 %v1034, %v1033
      %v1049 = vpack.c.b16 %v1036, %v1035
      %v1050 = vpack.c.b16 %v1038, %v1037
      %v1051 = vpack.c.b16 %v1040, %v1039
      %v1052 = vpack.c.b16 %v1042, %v1041
      %v1053 = vpack.c.b16 %v1044, %v1043
      %v1054 = vpack.c.b16 %v1046, %v1045
      %1063 = vmatprep.subr.bf16.mxu0 0
      %1064 = vmatpush1.bf16.msra.mxu0 %v1054
      %1065 = vmatprep.subr.bf16.mxu0 0
      %1066 = vmatpush1.bf16.msra.mxu0 %v1053
      %1067 = vmatprep.subr.bf16.mxu0 0
      %1068 = vmatpush1.bf16.msra.mxu0 %v1052
      %1069 = vmatprep.subr.bf16.mxu0 0
      %1070 = vmatpush1.bf16.msra.mxu0 %v1051
      %1071 = vmatprep.subr.bf16.mxu0 0
      %1072 = vmatpush1.bf16.msra.mxu0 %v1050
      %1073 = vmatprep.subr.bf16.mxu0 0
      %1074 = vmatpush1.bf16.msra.mxu0 %v1049
      %1075 = vmatprep.subr.bf16.mxu0 0
      %1076 = vmatpush1.bf16.msra.mxu0 %v1048
      %1077 = vmatprep.subr.bf16.mxu0 0
      %1078 = vmatpush1.bf16.msra.mxu0 %v1047
      %1079 = vmatprep.subr.bf16.mxu0 0
      %1080 = vmatpush2.bf16.msra.mxu0 0
      %1081 = vmatprep.subr.bf16.mxu0 0
      %1082 = vmatpush2.bf16.msra.mxu0 0
      %1083 = vmatprep.subr.bf16.mxu0 0
      %1084 = vmatpush2.bf16.msra.mxu0 0
      %1085 = vmatprep.subr.bf16.mxu0 0
      %1086 = vmatpush2.bf16.msra.mxu0 0
      %1087 = vmatprep.subr.bf16.mxu0 0
      %1088 = vmatpush2.bf16.msra.mxu0 0
      %1089 = vmatprep.subr.bf16.mxu0 0
      %1090 = vmatpush2.bf16.msra.mxu0 0
      %1091 = vmatprep.subr.bf16.mxu0 0
      %1092 = vmatpush2.bf16.msra.mxu0 0
      %1093 = vmatprep.subr.bf16.mxu0 0
      %1094 = vmatpush2.bf16.msra.mxu0 0
      %1095 = vmatprep.mubr.bf16.mxu0 0
      %1096 = vmatmul.mubr.bf16.gmra.mxu0 %v983
      %v1097 = vpop.f32.mrf.mxu0
      %v1098 = vadd.f32 %v1014, %v1097
      %v1099 = vpop.f32.mrf.mxu0
      %v1100 = vpop.f32.mrf.mxu0
      %v1101 = vadd.f32 %v1014, %v1100
      %v1102 = vpop.f32.mrf.mxu0
      %1103 = vmatprep.mubr.bf16.mxu0 0
      %1104 = vmatmul.mubr.bf16.gmra.mxu0 %v984
      %v1105 = vpop.f32.mrf.mxu0
      %v1106 = vadd.f32 %v1014, %v1105
      %v1107 = vpop.f32.mrf.mxu0
      %v1108 = vpop.f32.mrf.mxu0
      %v1109 = vadd.f32 %v1014, %v1108
      %v1110 = vpop.f32.mrf.mxu0
      %1111 = vmatprep.mubr.bf16.mxu0 0
      %1112 = vmatmul.mubr.bf16.gmra.mxu0 %v985
      %v1113 = vpop.f32.mrf.mxu0
      %v1114 = vadd.f32 %v1014, %v1113
      %v1115 = vpop.f32.mrf.mxu0
      %v1116 = vpop.f32.mrf.mxu0
      %v1117 = vadd.f32 %v1014, %v1116
      %v1118 = vpop.f32.mrf.mxu0
      %1119 = vmatprep.mubr.bf16.mxu0 0
      %1120 = vmatmul.mubr.bf16.gmra.mxu0 %v986
      %v1121 = vpop.f32.mrf.mxu0
      %v1122 = vadd.f32 %v1014, %v1121
      %v1123 = vpop.f32.mrf.mxu0
      %v1124 = vpop.f32.mrf.mxu0
      %v1125 = vadd.f32 %v1014, %v1124
      %v1126 = vpop.f32.mrf.mxu0
      %1127 = vmatprep.mubr.bf16.mxu0 0
      %1128 = vmatmul.mubr.bf16.gmra.mxu0 %v987
      %v1129 = vpop.f32.mrf.mxu0
      %v1130 = vadd.f32 %v1014, %v1129
      %v1131 = vpop.f32.mrf.mxu0
      %v1132 = vpop.f32.mrf.mxu0
      %v1133 = vadd.f32 %v1014, %v1132
      %v1134 = vpop.f32.mrf.mxu0
      %1135 = vmatprep.mubr.bf16.mxu0 0
      %1136 = vmatmul.mubr.bf16.gmra.mxu0 %v988
      %v1137 = vpop.f32.mrf.mxu0
      %v1138 = vadd.f32 %v1014, %v1137
      %v1139 = vpop.f32.mrf.mxu0
      %v1140 = vpop.f32.mrf.mxu0
      %v1141 = vadd.f32 %v1014, %v1140
      %v1142 = vpop.f32.mrf.mxu0
      %1143 = vmatprep.mubr.bf16.mxu0 0
      %1144 = vmatmul.mubr.bf16.gmra.mxu0 %v989
      %v1145 = vpop.f32.mrf.mxu0
      %v1146 = vadd.f32 %v1014, %v1145
      %v1147 = vpop.f32.mrf.mxu0
      %v1148 = vpop.f32.mrf.mxu0
      %v1149 = vadd.f32 %v1014, %v1148
      %v1150 = vpop.f32.mrf.mxu0
      %1151 = vmatprep.mubr.bf16.mxu0 0
      %1152 = vmatmul.mubr.bf16.gmra.mxu0 %v990
      %v1153 = vpop.f32.mrf.mxu0
      %v1154 = vadd.f32 %v1014, %v1153
      %v1155 = vpop.f32.mrf.mxu0
      %v1156 = vpop.f32.mrf.mxu0
      %v1157 = vadd.f32 %v1014, %v1156
      %v1158 = vpop.f32.mrf.mxu0
      %1159 = vmatprep.mubr.bf16.mxu0 0
      %1160 = vmatmul.mubr.bf16.gmra.mxu0 %v991
      %v1161 = vpop.f32.mrf.mxu0
      %v1162 = vadd.f32 %v1014, %v1161
      %v1163 = vpop.f32.mrf.mxu0
      %v1164 = vpop.f32.mrf.mxu0
      %v1165 = vadd.f32 %v1014, %v1164
      %v1166 = vpop.f32.mrf.mxu0
      %1167 = vmatprep.mubr.bf16.mxu0 0
      %1168 = vmatmul.mubr.bf16.gmra.mxu0 %v992
      %v1169 = vpop.f32.mrf.mxu0
      %v1170 = vadd.f32 %v1014, %v1169
      %v1171 = vpop.f32.mrf.mxu0
      %v1172 = vpop.f32.mrf.mxu0
      %v1173 = vpop.f32.mrf.mxu0
      %1174 = vdwg.mxu0
      %v1175 = vmul.f32 %v1098, %v1098
      %v1176 = vmul.f32 %v1101, %v1101
      %v1177 = vmul.f32 %v1106, %v1106
      %v1178 = vmul.f32 %v1109, %v1109
      %v1179 = vmul.f32 %v1114, %v1114
      %v1180 = vmul.f32 %v1117, %v1117
      %v1181 = vmul.f32 %v1122, %v1122
      %v1182 = vmul.f32 %v1125, %v1125
      %v1183 = vmul.f32 %v1130, %v1130
      %v1184 = vmul.f32 %v1133, %v1133
      %v1185 = vmul.f32 %v1138, %v1138
      %v1186 = vmul.f32 %v1141, %v1141
      %v1187 = vmul.f32 %v1146, %v1146
      %v1188 = vmul.f32 %v1149, %v1149
      %v1189 = vmul.f32 %v1154, %v1154
      %v1190 = vmul.f32 %v1157, %v1157
      %v1191 = vmul.f32 %v1162, %v1162
      %v1192 = vmul.f32 %v1165, %v1165
      %v1193 = vmul.f32 %v1170, %v1170
      %v1194 = vmul.f32 %v1098, %v1175
      %v1195 = vmul.f32 %v1101, %v1176
      %v1196 = vmul.f32 %v1106, %v1177
      %v1197 = vmul.f32 %v1109, %v1178
      %v1198 = vmul.f32 %v1114, %v1179
      %v1199 = vmul.f32 %v1117, %v1180
      %v1200 = vmul.f32 %v1122, %v1181
      %v1201 = vmul.f32 %v1125, %v1182
      %v1202 = vmul.f32 %v1130, %v1183
      %v1203 = vmul.f32 %v1133, %v1184
      %v1204 = vmul.f32 %v1138, %v1185
      %v1205 = vmul.f32 %v1141, %v1186
      %v1206 = vmul.f32 %v1146, %v1187
      %v1207 = vmul.f32 %v1149, %v1188
      %v1208 = vmul.f32 %v1154, %v1189
      %v1209 = vmul.f32 %v1157, %v1190
      %v1210 = vmul.f32 %v1162, %v1191
      %v1211 = vmul.f32 %v1165, %v1192
      %v1212 = vmul.f32 %v1170, %v1193
      %v1213 = vmul.f32 %v1194, 0.044715
      %v1214 = vmul.f32 %v1195, 0.044715
      %v1215 = vmul.f32 %v1196, 0.044715
      %v1216 = vmul.f32 %v1197, 0.044715
      %v1217 = vmul.f32 %v1198, 0.044715
      %v1218 = vmul.f32 %v1199, 0.044715
      %v1219 = vmul.f32 %v1200, 0.044715
      %v1220 = vmul.f32 %v1201, 0.044715
      %v1221 = vmul.f32 %v1202, 0.044715
      %v1222 = vmul.f32 %v1203, 0.044715
      %v1223 = vmul.f32 %v1204, 0.044715
      %v1224 = vmul.f32 %v1205, 0.044715
      %v1225 = vmul.f32 %v1206, 0.044715
      %v1226 = vmul.f32 %v1207, 0.044715
      %v1227 = vmul.f32 %v1208, 0.044715
      %v1228 = vmul.f32 %v1209, 0.044715
      %v1229 = vmul.f32 %v1210, 0.044715
      %v1230 = vmul.f32 %v1211, 0.044715
      %v1231 = vmul.f32 %v1212, 0.044715
      %v1232 = vadd.f32 %v1098, %v1213
      %v1233 = vadd.f32 %v1101, %v1214
      %v1234 = vadd.f32 %v1106, %v1215
      %v1235 = vadd.f32 %v1109, %v1216
      %v1236 = vadd.f32 %v1114, %v1217
      %v1237 = vadd.f32 %v1117, %v1218
      %v1238 = vadd.f32 %v1122, %v1219
      %v1239 = vadd.f32 %v1125, %v1220
      %v1240 = vadd.f32 %v1130, %v1221
      %v1241 = vadd.f32 %v1133, %v1222
      %v1242 = vadd.f32 %v1138, %v1223
      %v1243 = vadd.f32 %v1141, %v1224
      %v1244 = vadd.f32 %v1146, %v1225
      %v1245 = vadd.f32 %v1149, %v1226
      %v1246 = vadd.f32 %v1154, %v1227
      %v1247 = vadd.f32 %v1157, %v1228
      %v1248 = vadd.f32 %v1162, %v1229
      %v1249 = vadd.f32 %v1165, %v1230
      %v1250 = vadd.f32 %v1170, %v1231
      %v1251 = vmul.f32 %v1232, 0.7978846
      %v1252 = vmul.f32 %v1233, 0.7978846
      %v1253 = vmul.f32 %v1234, 0.7978846
      %v1254 = vmul.f32 %v1235, 0.7978846
      %v1255 = vmul.f32 %v1236, 0.7978846
      %v1256 = vmul.f32 %v1237, 0.7978846
      %v1257 = vmul.f32 %v1238, 0.7978846
      %v1258 = vmul.f32 %v1239, 0.7978846
      %v1259 = vmul.f32 %v1240, 0.7978846
      %v1260 = vmul.f32 %v1241, 0.7978846
      %v1261 = vmul.f32 %v1242, 0.7978846
      %v1262 = vmul.f32 %v1243, 0.7978846
      %v1263 = vmul.f32 %v1244, 0.7978846
      %v1264 = vmul.f32 %v1245, 0.7978846
      %v1265 = vmul.f32 %v1246, 0.7978846
      %v1266 = vmul.f32 %v1247, 0.7978846
      %v1267 = vmul.f32 %v1248, 0.7978846
      %v1268 = vmul.f32 %v1249, 0.7978846
      %v1269 = vmul.f32 %v1250, 0.7978846
      %v1270 = vtanh.pop %v1251
      %v1271 = vtanh.pop %v1252
      %v1272 = vtanh.pop %v1253
      %v1273 = vtanh.pop %v1254
      %v1274 = vtanh.pop %v1255
      %v1275 = vtanh.pop %v1256
      %v1276 = vtanh.pop %v1257
      %v1277 = vtanh.pop %v1258
      %v1278 = vtanh.pop %v1259
      %v1279 = vtanh.pop %v1260
      %v1280 = vtanh.pop %v1261
      %v1281 = vtanh.pop %v1262
      %v1282 = vtanh.pop %v1263
      %v1283 = vtanh.pop %v1264
      %v1284 = vtanh.pop %v1265
      %v1285 = vtanh.pop %v1266
      %v1286 = vtanh.pop %v1267
      %v1287 = vtanh.pop %v1268
      %v1288 = vtanh.pop %v1269
      %v1289 = vadd.f32 %v1270, 1.0
      %v1290 = vadd.f32 %v1271, 1.0
      %v1291 = vadd.f32 %v1272, 1.0
      %v1292 = vadd.f32 %v1273, 1.0
      %v1293 = vadd.f32 %v1274, 1.0
      %v1294 = vadd.f32 %v1275, 1.0
      %v1295 = vadd.f32 %v1276, 1.0
      %v1296 = vadd.f32 %v1277, 1.0
      %v1297 = vadd.f32 %v1278, 1.0
      %v1298 = vadd.f32 %v1279, 1.0
      %v1299 = vadd.f32 %v1280, 1.0
      %v1300 = vadd.f32 %v1281, 1.0
      %v1301 = vadd.f32 %v1282, 1.0
      %v1302 = vadd.f32 %v1283, 1.0
      %v1303 = vadd.f32 %v1284, 1.0
      %v1304 = vadd.f32 %v1285, 1.0
      %v1305 = vadd.f32 %v1286, 1.0
      %v1306 = vadd.f32 %v1287, 1.0
      %v1307 = vadd.f32 %v1288, 1.0
      %v1308 = vmul.f32 %v1289, 0.5
      %v1309 = vmul.f32 %v1290, 0.5
      %v1310 = vmul.f32 %v1291, 0.5
      %v1311 = vmul.f32 %v1292, 0.5
      %v1312 = vmul.f32 %v1293, 0.5
      %v1313 = vmul.f32 %v1294, 0.5
      %v1314 = vmul.f32 %v1295, 0.5
      %v1315 = vmul.f32 %v1296, 0.5
      %v1316 = vmul.f32 %v1297, 0.5
      %v1317 = vmul.f32 %v1298, 0.5
      %v1318 = vmul.f32 %v1299, 0.5
      %v1319 = vmul.f32 %v1300, 0.5
      %v1320 = vmul.f32 %v1301, 0.5
      %v1321 = vmul.f32 %v1302, 0.5
      %v1322 = vmul.f32 %v1303, 0.5
      %v1323 = vmul.f32 %v1304, 0.5
      %v1324 = vmul.f32 %v1305, 0.5
      %v1325 = vmul.f32 %v1306, 0.5
      %v1326 = vmul.f32 %v1307, 0.5
      %v1327 = vmul.f32 %v1098, %v1308
      %v1328 = vmul.f32 %v1101, %v1309
      %v1329 = vmul.f32 %v1106, %v1310
      %v1330 = vmul.f32 %v1109, %v1311
      %v1331 = vmul.f32 %v1114, %v1312
      %v1332 = vmul.f32 %v1117, %v1313
      %v1333 = vmul.f32 %v1122, %v1314
      %v1334 = vmul.f32 %v1125, %v1315
      %v1335 = vmul.f32 %v1130, %v1316
      %v1336 = vmul.f32 %v1133, %v1317
      %v1337 = vmul.f32 %v1138, %v1318
      %v1338 = vmul.f32 %v1141, %v1319
      %v1339 = vmul.f32 %v1146, %v1320
      %v1340 = vmul.f32 %v1149, %v1321
      %v1341 = vmul.f32 %v1154, %v1322
      %v1342 = vmul.f32 %v1157, %v1323
      %v1343 = vmul.f32 %v1162, %v1324
      %v1344 = vmul.f32 %v1165, %v1325
      %v1345 = vmul.f32 %v1170, %v1326
      %v1346 = vpack.c.bf16 %v1328, %v1327
      %v1347 = vpack.c.bf16 %v1330, %v1329
      %v1348 = vpack.c.bf16 %v1332, %v1331
      %v1349 = vpack.c.bf16 %v1334, %v1333
      %v1350 = vpack.c.bf16 %v1336, %v1335
      %v1351 = vpack.c.bf16 %v1338, %v1337
      %v1352 = vpack.c.bf16 %v1340, %v1339
      %v1353 = vpack.c.bf16 %v1342, %v1341
      %v1354 = vpack.c.bf16 %v1344, %v1343
      %v1355 = vpack.c.bf16 %v1345, %v1345
      %s1356 = scalar_lea.vmem %s3, 128
      %v1357 = vld [vmem:[%s1356] sm:$0xf]
      %v1358 = vld [vmem:[%s1356 + $0x4] sm:$0xf]
      %v1359 = vld [vmem:[%s1356 + $0x8] sm:$0xf]
      %v1360 = vld [vmem:[%s1356 + $0xc] sm:$0xf]
      %v1361 = vld [vmem:[%s1356 + $0x10] sm:$0xf]
      %v1362 = vld [vmem:[%s1356 + $0x14] sm:$0xf]
      %v1363 = vld [vmem:[%s1356 + $0x18] sm:$0xf]
      %v1364 = vld [vmem:[%s1356 + $0x1c] sm:$0xf]
      %v1365 = vld [vmem:[%s1356 + $0x20] sm:$0xf]
      %v1366 = vld [vmem:[%s1356 + $0x24] sm:$0xf]
      %v1367 = vld [vmem:[%s1356 + $0x28] sm:$0xf]
      %v1368 = vld [vmem:[%s1356 + $0x2c] sm:$0xf]
      %v1369 = vld [vmem:[%s1356 + $0x30] sm:$0xf]
      %v1370 = vld [vmem:[%s1356 + $0x34] sm:$0xf]
      %v1371 = vld [vmem:[%s1356 + $0x38] sm:$0xf]
      %v1372 = vld [vmem:[%s1356 + $0x3c] sm:$0xf]
      %v1373 = vld [vmem:[%s4 + $0x3] sm:$0x1]
      %v1374 = vlaneseq
      %v1375 = vshrl.u32 %v1374, 7
      %v1376 = vsub.s32 0, %v1375
      %v1377 = vrot.slane %v1373, %v1376
      %v1394 = vunpack.c.l.b16 %v1357
      %v1395 = vunpack.c.l.b16 %v1358
      %v1396 = vunpack.c.l.b16 %v1359
      %v1397 = vunpack.c.l.b16 %v1360
      %v1398 = vunpack.c.l.b16 %v1361
      %v1399 = vunpack.c.l.b16 %v1362
      %v1400 = vunpack.c.l.b16 %v1363
      %v1401 = vunpack.c.l.b16 %v1364
      %v1402 = vunpack.c.l.b16 %v1365
      %v1403 = vunpack.c.l.b16 %v1366
      %v1404 = vunpack.c.l.b16 %v1367
      %v1405 = vunpack.c.l.b16 %v1368
      %v1406 = vunpack.c.l.b16 %v1369
      %v1407 = vunpack.c.l.b16 %v1370
      %v1408 = vunpack.c.l.b16 %v1371
      %v1409 = vunpack.c.l.b16 %v1372
      %v1410 = vpack.c.b16 %v1395, %v1394
      %v1411 = vpack.c.b16 %v1397, %v1396
      %v1412 = vpack.c.b16 %v1399, %v1398
      %v1413 = vpack.c.b16 %v1401, %v1400
      %v1414 = vpack.c.b16 %v1403, %v1402
      %v1415 = vpack.c.b16 %v1405, %v1404
      %v1416 = vpack.c.b16 %v1407, %v1406
      %v1417 = vpack.c.b16 %v1409, %v1408
      %1426 = vmatprep.subr.bf16.mxu0 0
      %1427 = vmatpush1.bf16.msra.mxu0 %v1417
      %1428 = vmatprep.subr.bf16.mxu0 0
      %1429 = vmatpush1.bf16.msra.mxu0 %v1416
      %1430 = vmatprep.subr.bf16.mxu0 0
      %1431 = vmatpush1.bf16.msra.mxu0 %v1415
      %1432 = vmatprep.subr.bf16.mxu0 0
      %1433 = vmatpush1.bf16.msra.mxu0 %v1414
      %1434 = vmatprep.subr.bf16.mxu0 0
      %1435 = vmatpush1.bf16.msra.mxu0 %v1413
      %1436 = vmatprep.subr.bf16.mxu0 0
      %1437 = vmatpush1.bf16.msra.mxu0 %v1412
      %1438 = vmatprep.subr.bf16.mxu0 0
      %1439 = vmatpush1.bf16.msra.mxu0 %v1411
      %1440 = vmatprep.subr.bf16.mxu0 0
      %1441 = vmatpush1.bf16.msra.mxu0 %v1410
      %1442 = vmatprep.subr.bf16.mxu0 0
      %1443 = vmatpush2.bf16.msra.mxu0 0
      %1444 = vmatprep.subr.bf16.mxu0 0
      %1445 = vmatpush2.bf16.msra.mxu0 0
      %1446 = vmatprep.subr.bf16.mxu0 0
      %1447 = vmatpush2.bf16.msra.mxu0 0
      %1448 = vmatprep.subr.bf16.mxu0 0
      %1449 = vmatpush2.bf16.msra.mxu0 0
      %1450 = vmatprep.subr.bf16.mxu0 0
      %1451 = vmatpush2.bf16.msra.mxu0 0
      %1452 = vmatprep.subr.bf16.mxu0 0
      %1453 = vmatpush2.bf16.msra.mxu0 0
      %1454 = vmatprep.subr.bf16.mxu0 0
      %1455 = vmatpush2.bf16.msra.mxu0 0
      %1456 = vmatprep.subr.bf16.mxu0 0
      %1457 = vmatpush2.bf16.msra.mxu0 0
      %1458 = vmatprep.mubr.bf16.mxu0 0
      %1459 = vmatmul.mubr.bf16.gmra.mxu0 %v1346
      %v1460 = vpop.f32.mrf.mxu0
      %v1461 = vadd.f32 %v1377, %v1460
      %v1462 = vpop.f32.mrf.mxu0
      %v1463 = vpop.f32.mrf.mxu0
      %v1464 = vadd.f32 %v1377, %v1463
      %v1465 = vpop.f32.mrf.mxu0
      %1466 = vmatprep.mubr.bf16.mxu0 0
      %1467 = vmatmul.mubr.bf16.gmra.mxu0 %v1347
      %v1468 = vpop.f32.mrf.mxu0
      %v1469 = vadd.f32 %v1377, %v1468
      %v1470 = vpop.f32.mrf.mxu0
      %v1471 = vpop.f32.mrf.mxu0
      %v1472 = vadd.f32 %v1377, %v1471
      %v1473 = vpop.f32.mrf.mxu0
      %1474 = vmatprep.mubr.bf16.mxu0 0
      %1475 = vmatmul.mubr.bf16.gmra.mxu0 %v1348
      %v1476 = vpop.f32.mrf.mxu0
      %v1477 = vadd.f32 %v1377, %v1476
      %v1478 = vpop.f32.mrf.mxu0
      %v1479 = vpop.f32.mrf.mxu0
      %v1480 = vadd.f32 %v1377, %v1479
      %v1481 = vpop.f32.mrf.mxu0
      %1482 = vmatprep.mubr.bf16.mxu0 0
      %1483 = vmatmul.mubr.bf16.gmra.mxu0 %v1349
      %v1484 = vpop.f32.mrf.mxu0
      %v1485 = vadd.f32 %v1377, %v1484
      %v1486 = vpop.f32.mrf.mxu0
      %v1487 = vpop.f32.mrf.mxu0
      %v1488 = vadd.f32 %v1377, %v1487
      %v1489 = vpop.f32.mrf.mxu0
      %1490 = vmatprep.mubr.bf16.mxu0 0
      %1491 = vmatmul.mubr.bf16.gmra.mxu0 %v1350
      %v1492 = vpop.f32.mrf.mxu0
      %v1493 = vadd.f32 %v1377, %v1492
      %v1494 = vpop.f32.mrf.mxu0
      %v1495 = vpop.f32.mrf.mxu0
      %v1496 = vadd.f32 %v1377, %v1495
      %v1497 = vpop.f32.mrf.mxu0
      %1498 = vmatprep.mubr.bf16.mxu0 0
      %1499 = vmatmul.mubr.bf16.gmra.mxu0 %v1351
      %v1500 = vpop.f32.mrf.mxu0
      %v1501 = vadd.f32 %v1377, %v1500
      %v1502 = vpop.f32.mrf.mxu0
      %v1503 = vpop.f32.mrf.mxu0
      %v1504 = vadd.f32 %v1377, %v1503
      %v1505 = vpop.f32.mrf.mxu0
      %1506 = vmatprep.mubr.bf16.mxu0 0
      %1507 = vmatmul.mubr.bf16.gmra.mxu0 %v1352
      %v1508 = vpop.f32.mrf.mxu0
      %v1509 = vadd.f32 %v1377, %v1508
      %v1510 = vpop.f32.mrf.mxu0
      %v1511 = vpop.f32.mrf.mxu0
      %v1512 = vadd.f32 %v1377, %v1511
      %v1513 = vpop.f32.mrf.mxu0
      %1514 = vmatprep.mubr.bf16.mxu0 0
      %1515 = vmatmul.mubr.bf16.gmra.mxu0 %v1353
      %v1516 = vpop.f32.mrf.mxu0
      %v1517 = vadd.f32 %v1377, %v1516
      %v1518 = vpop.f32.mrf.mxu0
      %v1519 = vpop.f32.mrf.mxu0
      %v1520 = vadd.f32 %v1377, %v1519
      %v1521 = vpop.f32.mrf.mxu0
      %1522 = vmatprep.mubr.bf16.mxu0 0
      %1523 = vmatmul.mubr.bf16.gmra.mxu0 %v1354
      %v1524 = vpop.f32.mrf.mxu0
      %v1525 = vadd.f32 %v1377, %v1524
      %v1526 = vpop.f32.mrf.mxu0
      %v1527 = vpop.f32.mrf.mxu0
      %v1528 = vadd.f32 %v1377, %v1527
      %v1529 = vpop.f32.mrf.mxu0
      %1530 = vmatprep.mubr.bf16.mxu0 0
      %1531 = vmatmul.mubr.bf16.gmra.mxu0 %v1355
      %v1532 = vpop.f32.mrf.mxu0
      %v1533 = vadd.f32 %v1377, %v1532
      %v1534 = vpop.f32.mrf.mxu0
      %v1535 = vpop.f32.mrf.mxu0
      %v1536 = vpop.f32.mrf.mxu0
      %1537 = vdwg.mxu0
      %v1538 = vmul.f32 %v1461, %v1461
      %v1539 = vmul.f32 %v1464, %v1464
      %v1540 = vmul.f32 %v1469, %v1469
      %v1541 = vmul.f32 %v1472, %v1472
      %v1542 = vmul.f32 %v1477, %v1477
      %v1543 = vmul.f32 %v1480, %v1480
      %v1544 = vmul.f32 %v1485, %v1485
      %v1545 = vmul.f32 %v1488, %v1488
      %v1546 = vmul.f32 %v1493, %v1493
      %v1547 = vmul.f32 %v1496, %v1496
      %v1548 = vmul.f32 %v1501, %v1501
      %v1549 = vmul.f32 %v1504, %v1504
      %v1550 = vmul.f32 %v1509, %v1509
      %v1551 = vmul.f32 %v1512, %v1512
      %v1552 = vmul.f32 %v1517, %v1517
      %v1553 = vmul.f32 %v1520, %v1520
      %v1554 = vmul.f32 %v1525, %v1525
      %v1555 = vmul.f32 %v1528, %v1528
      %v1556 = vmul.f32 %v1533, %v1533
      %v1557 = vmul.f32 %v1461, %v1538
      %v1558 = vmul.f32 %v1464, %v1539
      %v1559 = vmul.f32 %v1469, %v1540
      %v1560 = vmul.f32 %v1472, %v1541
      %v1561 = vmul.f32 %v1477, %v1542
      %v1562 = vmul.f32 %v1480, %v1543
      %v1563 = vmul.f32 %v1485, %v1544
      %v1564 = vmul.f32 %v1488, %v1545
      %v1565 = vmul.f32 %v1493, %v1546
      %v1566 = vmul.f32 %v1496, %v1547
      %v1567 = vmul.f32 %v1501, %v1548
      %v1568 = vmul.f32 %v1504, %v1549
      %v1569 = vmul.f32 %v1509, %v1550
      %v1570 = vmul.f32 %v1512, %v1551
      %v1571 = vmul.f32 %v1517, %v1552
      %v1572 = vmul.f32 %v1520, %v1553
      %v1573 = vmul.f32 %v1525, %v1554
      %v1574 = vmul.f32 %v1528, %v1555
      %v1575 = vmul.f32 %v1533, %v1556
      %v1576 = vmul.f32 %v1557, 0.044715
      %v1577 = vmul.f32 %v1558, 0.044715
      %v1578 = vmul.f32 %v1559, 0.044715
      %v1579 = vmul.f32 %v1560, 0.044715
      %v1580 = vmul.f32 %v1561, 0.044715
      %v1581 = vmul.f32 %v1562, 0.044715
      %v1582 = vmul.f32 %v1563, 0.044715
      %v1583 = vmul.f32 %v1564, 0.044715
      %v1584 = vmul.f32 %v1565, 0.044715
      %v1585 = vmul.f32 %v1566, 0.044715
      %v1586 = vmul.f32 %v1567, 0.044715
      %v1587 = vmul.f32 %v1568, 0.044715
      %v1588 = vmul.f32 %v1569, 0.044715
      %v1589 = vmul.f32 %v1570, 0.044715
      %v1590 = vmul.f32 %v1571, 0.044715
      %v1591 = vmul.f32 %v1572, 0.044715
      %v1592 = vmul.f32 %v1573, 0.044715
      %v1593 = vmul.f32 %v1574, 0.044715
      %v1594 = vmul.f32 %v1575, 0.044715
      %v1595 = vadd.f32 %v1461, %v1576
      %v1596 = vadd.f32 %v1464, %v1577
      %v1597 = vadd.f32 %v1469, %v1578
      %v1598 = vadd.f32 %v1472, %v1579
      %v1599 = vadd.f32 %v1477, %v1580
      %v1600 = vadd.f32 %v1480, %v1581
      %v1601 = vadd.f32 %v1485, %v1582
      %v1602 = vadd.f32 %v1488, %v1583
      %v1603 = vadd.f32 %v1493, %v1584
      %v1604 = vadd.f32 %v1496, %v1585
      %v1605 = vadd.f32 %v1501, %v1586
      %v1606 = vadd.f32 %v1504, %v1587
      %v1607 = vadd.f32 %v1509, %v1588
      %v1608 = vadd.f32 %v1512, %v1589
      %v1609 = vadd.f32 %v1517, %v1590
      %v1610 = vadd.f32 %v1520, %v1591
      %v1611 = vadd.f32 %v1525, %v1592
      %v1612 = vadd.f32 %v1528, %v1593
      %v1613 = vadd.f32 %v1533, %v1594
      %v1614 = vmul.f32 %v1595, 0.7978846
      %v1615 = vmul.f32 %v1596, 0.7978846
      %v1616 = vmul.f32 %v1597, 0.7978846
      %v1617 = vmul.f32 %v1598, 0.7978846
      %v1618 = vmul.f32 %v1599, 0.7978846
      %v1619 = vmul.f32 %v1600, 0.7978846
      %v1620 = vmul.f32 %v1601, 0.7978846
      %v1621 = vmul.f32 %v1602, 0.7978846
      %v1622 = vmul.f32 %v1603, 0.7978846
      %v1623 = vmul.f32 %v1604, 0.7978846
      %v1624 = vmul.f32 %v1605, 0.7978846
      %v1625 = vmul.f32 %v1606, 0.7978846
      %v1626 = vmul.f32 %v1607, 0.7978846
      %v1627 = vmul.f32 %v1608, 0.7978846
      %v1628 = vmul.f32 %v1609, 0.7978846
      %v1629 = vmul.f32 %v1610, 0.7978846
      %v1630 = vmul.f32 %v1611, 0.7978846
      %v1631 = vmul.f32 %v1612, 0.7978846
      %v1632 = vmul.f32 %v1613, 0.7978846
      %v1633 = vtanh.pop %v1614
      %v1634 = vtanh.pop %v1615
      %v1635 = vtanh.pop %v1616
      %v1636 = vtanh.pop %v1617
      %v1637 = vtanh.pop %v1618
      %v1638 = vtanh.pop %v1619
      %v1639 = vtanh.pop %v1620
      %v1640 = vtanh.pop %v1621
      %v1641 = vtanh.pop %v1622
      %v1642 = vtanh.pop %v1623
      %v1643 = vtanh.pop %v1624
      %v1644 = vtanh.pop %v1625
      %v1645 = vtanh.pop %v1626
      %v1646 = vtanh.pop %v1627
      %v1647 = vtanh.pop %v1628
      %v1648 = vtanh.pop %v1629
      %v1649 = vtanh.pop %v1630
      %v1650 = vtanh.pop %v1631
      %v1651 = vtanh.pop %v1632
      %v1652 = vadd.f32 %v1633, 1.0
      %v1653 = vadd.f32 %v1634, 1.0
      %v1654 = vadd.f32 %v1635, 1.0
      %v1655 = vadd.f32 %v1636, 1.0
      %v1656 = vadd.f32 %v1637, 1.0
      %v1657 = vadd.f32 %v1638, 1.0
      %v1658 = vadd.f32 %v1639, 1.0
      %v1659 = vadd.f32 %v1640, 1.0
      %v1660 = vadd.f32 %v1641, 1.0
      %v1661 = vadd.f32 %v1642, 1.0
      %v1662 = vadd.f32 %v1643, 1.0
      %v1663 = vadd.f32 %v1644, 1.0
      %v1664 = vadd.f32 %v1645, 1.0
      %v1665 = vadd.f32 %v1646, 1.0
      %v1666 = vadd.f32 %v1647, 1.0
      %v1667 = vadd.f32 %v1648, 1.0
      %v1668 = vadd.f32 %v1649, 1.0
      %v1669 = vadd.f32 %v1650, 1.0
      %v1670 = vadd.f32 %v1651, 1.0
      %v1671 = vmul.f32 %v1652, 0.5
      %v1672 = vmul.f32 %v1653, 0.5
      %v1673 = vmul.f32 %v1654, 0.5
      %v1674 = vmul.f32 %v1655, 0.5
      %v1675 = vmul.f32 %v1656, 0.5
      %v1676 = vmul.f32 %v1657, 0.5
      %v1677 = vmul.f32 %v1658, 0.5
      %v1678 = vmul.f32 %v1659, 0.5
      %v1679 = vmul.f32 %v1660, 0.5
      %v1680 = vmul.f32 %v1661, 0.5
      %v1681 = vmul.f32 %v1662, 0.5
      %v1682 = vmul.f32 %v1663, 0.5
      %v1683 = vmul.f32 %v1664, 0.5
      %v1684 = vmul.f32 %v1665, 0.5
      %v1685 = vmul.f32 %v1666, 0.5
      %v1686 = vmul.f32 %v1667, 0.5
      %v1687 = vmul.f32 %v1668, 0.5
      %v1688 = vmul.f32 %v1669, 0.5
      %v1689 = vmul.f32 %v1670, 0.5
      %v1690 = vmul.f32 %v1461, %v1671
      %v1691 = vmul.f32 %v1464, %v1672
      %v1692 = vmul.f32 %v1469, %v1673
      %v1693 = vmul.f32 %v1472, %v1674
      %v1694 = vmul.f32 %v1477, %v1675
      %v1695 = vmul.f32 %v1480, %v1676
      %v1696 = vmul.f32 %v1485, %v1677
      %v1697 = vmul.f32 %v1488, %v1678
      %v1698 = vmul.f32 %v1493, %v1679
      %v1699 = vmul.f32 %v1496, %v1680
      %v1700 = vmul.f32 %v1501, %v1681
      %v1701 = vmul.f32 %v1504, %v1682
      %v1702 = vmul.f32 %v1509, %v1683
      %v1703 = vmul.f32 %v1512, %v1684
      %v1704 = vmul.f32 %v1517, %v1685
      %v1705 = vmul.f32 %v1520, %v1686
      %v1706 = vmul.f32 %v1525, %v1687
      %v1707 = vmul.f32 %v1528, %v1688
      %v1708 = vmul.f32 %v1533, %v1689
      %v1709 = vpack.c.bf16 %v1691, %v1690
      %v1710 = vpack.c.bf16 %v1693, %v1692
      %v1711 = vpack.c.bf16 %v1695, %v1694
      %v1712 = vpack.c.bf16 %v1697, %v1696
      %v1713 = vpack.c.bf16 %v1699, %v1698
      %v1714 = vpack.c.bf16 %v1701, %v1700
      %v1715 = vpack.c.bf16 %v1703, %v1702
      %v1716 = vpack.c.bf16 %v1705, %v1704
      %v1717 = vpack.c.bf16 %v1707, %v1706
      %v1718 = vpack.c.bf16 %v1708, %v1708
      %v1719 = vld [vmem:[%s5] sm:$0xf]
      %v1720 = vld [vmem:[%s5 + $0x4] sm:$0xf]
      %v1721 = vld [vmem:[%s5 + $0x8] sm:$0xf]
      %v1722 = vld [vmem:[%s5 + $0xc] sm:$0xf]
      %v1723 = vld [vmem:[%s5 + $0x10] sm:$0xf]
      %v1724 = vld [vmem:[%s5 + $0x14] sm:$0xf]
      %v1725 = vld [vmem:[%s5 + $0x18] sm:$0xf]
      %v1726 = vld [vmem:[%s5 + $0x1c] sm:$0xf]
      %v1727 = vld [vmem:[%s5 + $0x20] sm:$0xf]
      %v1728 = vld [vmem:[%s5 + $0x24] sm:$0xf]
      %v1729 = vld [vmem:[%s5 + $0x28] sm:$0xf]
      %v1730 = vld [vmem:[%s5 + $0x2c] sm:$0xf]
      %v1731 = vld [vmem:[%s5 + $0x30] sm:$0xf]
      %v1732 = vld [vmem:[%s5 + $0x34] sm:$0xf]
      %v1733 = vld [vmem:[%s5 + $0x38] sm:$0xf]
      %v1734 = vld [vmem:[%s5 + $0x3c] sm:$0xf]
      %v1735 = vld [vmem:[%s6] sm:$0x1]
      %v1737 = vlaneseq
      %v1738 = vshrl.u32 %v1737, 7
      %v1739 = vsub.s32 0, %v1738
      %v1740 = vrot.slane %v1735, %v1739
      %v1758 = vunpack.c.l.b16 %v1719
      %v1759 = vunpack.c.l.b16 %v1720
      %v1760 = vunpack.c.l.b16 %v1721
      %v1761 = vunpack.c.l.b16 %v1722
      %v1762 = vunpack.c.l.b16 %v1723
      %v1763 = vunpack.c.l.b16 %v1724
      %v1764 = vunpack.c.l.b16 %v1725
      %v1765 = vunpack.c.l.b16 %v1726
      %v1766 = vunpack.c.l.b16 %v1727
      %v1767 = vunpack.c.l.b16 %v1728
      %v1768 = vunpack.c.l.b16 %v1729
      %v1769 = vunpack.c.l.b16 %v1730
      %v1770 = vunpack.c.l.b16 %v1731
      %v1771 = vunpack.c.l.b16 %v1732
      %v1772 = vunpack.c.l.b16 %v1733
      %v1773 = vunpack.c.l.b16 %v1734
      %v1774 = vpack.c.b16 %v1759, %v1758
      %v1775 = vpack.c.b16 %v1761, %v1760
      %v1776 = vpack.c.b16 %v1763, %v1762
      %v1777 = vpack.c.b16 %v1765, %v1764
      %v1778 = vpack.c.b16 %v1767, %v1766
      %v1779 = vpack.c.b16 %v1769, %v1768
      %v1780 = vpack.c.b16 %v1771, %v1770
      %v1781 = vpack.c.b16 %v1773, %v1772
      %1790 = vmatprep.subr.bf16.mxu0 0
      %1791 = vmatpush1.bf16.msra.mxu0 %v1781
      %1792 = vmatprep.subr.bf16.mxu0 0
      %1793 = vmatpush1.bf16.msra.mxu0 %v1780
      %1794 = vmatprep.subr.bf16.mxu0 0
      %1795 = vmatpush1.bf16.msra.mxu0 %v1779
      %1796 = vmatprep.subr.bf16.mxu0 0
      %1797 = vmatpush1.bf16.msra.mxu0 %v1778
      %1798 = vmatprep.subr.bf16.mxu0 0
      %1799 = vmatpush1.bf16.msra.mxu0 %v1777
      %1800 = vmatprep.subr.bf16.mxu0 0
      %1801 = vmatpush1.bf16.msra.mxu0 %v1776
      %1802 = vmatprep.subr.bf16.mxu0 0
      %1803 = vmatpush1.bf16.msra.mxu0 %v1775
      %1804 = vmatprep.subr.bf16.mxu0 0
      %1805 = vmatpush1.bf16.msra.mxu0 %v1774
      %1806 = vmatprep.subr.bf16.mxu0 0
      %1807 = vmatpush2.bf16.msra.mxu0 0
      %1808 = vmatprep.subr.bf16.mxu0 0
      %1809 = vmatpush2.bf16.msra.mxu0 0
      %1810 = vmatprep.subr.bf16.mxu0 0
      %1811 = vmatpush2.bf16.msra.mxu0 0
      %1812 = vmatprep.subr.bf16.mxu0 0
      %1813 = vmatpush2.bf16.msra.mxu0 0
      %1814 = vmatprep.subr.bf16.mxu0 0
      %1815 = vmatpush2.bf16.msra.mxu0 0
      %1816 = vmatprep.subr.bf16.mxu0 0
      %1817 = vmatpush2.bf16.msra.mxu0 0
      %1818 = vmatprep.subr.bf16.mxu0 0
      %1819 = vmatpush2.bf16.msra.mxu0 0
      %1820 = vmatprep.subr.bf16.mxu0 0
      %1821 = vmatpush2.bf16.msra.mxu0 0
      %1822 = vmatprep.mubr.bf16.mxu0 0
      %1823 = vmatmul.mubr.bf16.gmra.mxu0 %v1709
      %v1824 = vpop.f32.mrf.mxu0
      %v1825 = vadd.f32 %v1740, %v1824
      %v1826 = vpop.f32.mrf.mxu0
      %v1827 = vpop.f32.mrf.mxu0
      %v1828 = vadd.f32 %v1740, %v1827
      %v1829 = vpop.f32.mrf.mxu0
      %1830 = vmatprep.mubr.bf16.mxu0 0
      %1831 = vmatmul.mubr.bf16.gmra.mxu0 %v1710
      %v1832 = vpop.f32.mrf.mxu0
      %v1833 = vadd.f32 %v1740, %v1832
      %v1834 = vpop.f32.mrf.mxu0
      %v1835 = vpop.f32.mrf.mxu0
      %v1836 = vadd.f32 %v1740, %v1835
      %v1837 = vpop.f32.mrf.mxu0
      %1838 = vmatprep.mubr.bf16.mxu0 0
      %1839 = vmatmul.mubr.bf16.gmra.mxu0 %v1711
      %v1840 = vpop.f32.mrf.mxu0
      %v1841 = vadd.f32 %v1740, %v1840
      %v1842 = vpop.f32.mrf.mxu0
      %v1843 = vpop.f32.mrf.mxu0
      %v1844 = vadd.f32 %v1740, %v1843
      %v1845 = vpop.f32.mrf.mxu0
      %1846 = vmatprep.mubr.bf16.mxu0 0
      %1847 = vmatmul.mubr.bf16.gmra.mxu0 %v1712
      %v1848 = vpop.f32.mrf.mxu0
      %v1849 = vadd.f32 %v1740, %v1848
      %v1850 = vpop.f32.mrf.mxu0
      %v1851 = vpop.f32.mrf.mxu0
      %v1852 = vadd.f32 %v1740, %v1851
      %v1853 = vpop.f32.mrf.mxu0
      %1854 = vmatprep.mubr.bf16.mxu0 0
      %1855 = vmatmul.mubr.bf16.gmra.mxu0 %v1713
      %v1856 = vpop.f32.mrf.mxu0
      %v1857 = vadd.f32 %v1740, %v1856
      %v1858 = vpop.f32.mrf.mxu0
      %v1859 = vpop.f32.mrf.mxu0
      %v1860 = vadd.f32 %v1740, %v1859
      %v1861 = vpop.f32.mrf.mxu0
      %1862 = vmatprep.mubr.bf16.mxu0 0
      %1863 = vmatmul.mubr.bf16.gmra.mxu0 %v1714
      %v1864 = vpop.f32.mrf.mxu0
      %v1865 = vadd.f32 %v1740, %v1864
      %v1866 = vpop.f32.mrf.mxu0
      %v1867 = vpop.f32.mrf.mxu0
      %v1868 = vadd.f32 %v1740, %v1867
      %v1869 = vpop.f32.mrf.mxu0
      %1870 = vmatprep.mubr.bf16.mxu0 0
      %1871 = vmatmul.mubr.bf16.gmra.mxu0 %v1715
      %v1872 = vpop.f32.mrf.mxu0
      %v1873 = vadd.f32 %v1740, %v1872
      %v1874 = vpop.f32.mrf.mxu0
      %v1875 = vpop.f32.mrf.mxu0
      %v1876 = vadd.f32 %v1740, %v1875
      %v1877 = vpop.f32.mrf.mxu0
      %1878 = vmatprep.mubr.bf16.mxu0 0
      %1879 = vmatmul.mubr.bf16.gmra.mxu0 %v1716
      %v1880 = vpop.f32.mrf.mxu0
      %v1881 = vadd.f32 %v1740, %v1880
      %v1882 = vpop.f32.mrf.mxu0
      %v1883 = vpop.f32.mrf.mxu0
      %v1884 = vadd.f32 %v1740, %v1883
      %v1885 = vpop.f32.mrf.mxu0
      %1886 = vmatprep.mubr.bf16.mxu0 0
      %1887 = vmatmul.mubr.bf16.gmra.mxu0 %v1717
      %v1888 = vpop.f32.mrf.mxu0
      %v1889 = vadd.f32 %v1740, %v1888
      %v1890 = vpop.f32.mrf.mxu0
      %v1891 = vpop.f32.mrf.mxu0
      %v1892 = vadd.f32 %v1740, %v1891
      %v1893 = vpop.f32.mrf.mxu0
      %1894 = vmatprep.mubr.bf16.mxu0 0
      %1895 = vmatmul.mubr.bf16.gmra.mxu0 %v1718
      %v1896 = vpop.f32.mrf.mxu0
      %v1897 = vadd.f32 %v1740, %v1896
      %v1898 = vpop.f32.mrf.mxu0
      %v1899 = vpop.f32.mrf.mxu0
      %v1900 = vpop.f32.mrf.mxu0
      %1901 = vdwg.mxu0
      %vm1902 = vcmask 31744
      %1903 = vst.msk [vmem:[%s280] sm:$0xff] %vm1902, %v1825
      %1904 = vst.msk [vmem:[%s280 + $0x8] sm:$0xff] %vm1902, %v1828
      %1905 = vst.msk [vmem:[%s280 + $0x10] sm:$0xff] %vm1902, %v1833
      %1906 = vst.msk [vmem:[%s280 + $0x18] sm:$0xff] %vm1902, %v1836
      %1907 = vst.msk [vmem:[%s280 + $0x20] sm:$0xff] %vm1902, %v1841
      %1908 = vst.msk [vmem:[%s280 + $0x28] sm:$0xff] %vm1902, %v1844
      %1909 = vst.msk [vmem:[%s280 + $0x30] sm:$0xff] %vm1902, %v1849
      %1910 = vst.msk [vmem:[%s280 + $0x38] sm:$0xff] %vm1902, %v1852
      %1911 = vst.msk [vmem:[%s280 + $0x40] sm:$0xff] %vm1902, %v1857
      %1912 = vst.msk [vmem:[%s280 + $0x48] sm:$0xff] %vm1902, %v1860
      %1913 = vst.msk [vmem:[%s280 + $0x50] sm:$0xff] %vm1902, %v1865
      %1914 = vst.msk [vmem:[%s280 + $0x58] sm:$0xff] %vm1902, %v1868
      %1915 = vst.msk [vmem:[%s280 + $0x60] sm:$0xff] %vm1902, %v1873
      %1916 = vst.msk [vmem:[%s280 + $0x68] sm:$0xff] %vm1902, %v1876
      %1917 = vst.msk [vmem:[%s280 + $0x70] sm:$0xff] %vm1902, %v1881
      %1918 = vst.msk [vmem:[%s280 + $0x78] sm:$0xff] %vm1902, %v1884
      %1919 = vst.msk [vmem:[%s280 + $0x80] sm:$0xff] %vm1902, %v1889
      %1920 = vst.msk [vmem:[%s280 + $0x88] sm:$0xff] %vm1902, %v1892
      %1921 = vst.msk [vmem:[%s280 + $0x90] sm:$0xff] %vm1902, %v1897
      %s1922 = smul.u32 19, %s18
      %p1923 = scmp.lt.s32.totalorder %s1922, 37
      %s1924 = scalar_select %p1923, %s1922, 37
      %s1925 = smul.addr %s1924, 8
      %s1926 = scalar_lea.vmem %s7, %s1925
      // Predicated region
      $region49: #{tpu_custom_call.1} parent=47 // pred_check
        %p1927 = pneg %p188
      $region50: #{tpu_custom_call.1} parent=47 // pred_check_branch
        %1929 = sbr.rel (%p1927) target = $region52
      $region51: #{tpu_custom_call.1} parent=47 // pred_region
        %s1930 = smul.u32 19, %s18
      $region52: #{tpu_custom_call.1} parent=47 // pred_fallthru
        _
    $region48: #{tpu_custom_call.1} parent=5 // pred_fallthru
      _
    %p1931 = scmp.le.s32.totalorder 2, %s13
    // Predicated region
    $region53: #{tpu_custom_call.1} parent=5 // pred_check
      %p1932 = pneg %p1931
    $region54: #{tpu_custom_call.1} parent=5 // pred_check_branch
      %1934 = sbr.rel (%p1932) target = $region56
    $region55: #{tpu_custom_call.1} parent=5 // pred_region
      %s1935 = ssub.s32 %s13, 2
      // Predicated region
      $region57: #{tpu_custom_call.1} parent=55 // pred_check
        %p1936 = pneg %p194
      $region58: #{tpu_custom_call.1} parent=55 // pred_check_branch
        %1938 = sbr.rel (%p1936) target = $region60
      $region59: #{tpu_custom_call.1} parent=55 // pred_region
        %s1939 = smul.u32 19, %s19
        %p1940 = scmp.lt.s32.totalorder %s1939, 37
        %s1941 = scalar_select %p1940, %s1939, 37
        %s1942 = smul.addr %s1941, 8
        %s1943 = scalar_lea.vmem %s7, %s1942
      $region60: #{tpu_custom_call.1} parent=55 // pred_fallthru
        _
    $region56: #{tpu_custom_call.1} parent=5 // pred_fallthru
      _
  $region6: #{tpu_custom_call.1} parent=0 // loop_footer
    %s17 = sadd.s32 1, %s13
  $region7: #{tpu_custom_call.1} parent=0 // loop_footer_branch
    %12 = sbr.rel target = $region3
  $region8: #{tpu_custom_call.1} parent=0 // loop_exit
    _

</llo_original>
